<compile_context>
chip_gen: v7x
topology: tpu7x:2x2x1
jax: 0.10.0
libtpu: 0.0.40
codegen_flags: <defaults>
</compile_context>

<pallas_src>
import functools

import numpy as np
import jax
import jax.numpy as jnp
from jax.experimental import pallas as pl
from jax.experimental.pallas import tpu as pltpu

_EPS = 1e-5


# ----------------------------------------------------------------------------
# Generation-aware compiler params
# ----------------------------------------------------------------------------
@functools.lru_cache(maxsize=None)
def _vmem_limit_bytes():
    cap = 64 * 1024 * 1024                 # conservative fallback (v7x-safe)
    try:
        cap = int(getattr(pltpu.get_tpu_info(), "vmem_capacity_bytes", cap))
    except Exception:
        pass
    # ~75% of physical VMEM, capped: ~96 MiB on v5e/v6e (128 MiB), 48 MiB on
    # v7x (64 MiB); leaves headroom for pipeline buffers / compiler scratch.
    return int(min(cap * 3 // 4, 100 * 1024 * 1024))


def _compiler_params():
    return pltpu.CompilerParams(
        dimension_semantics=("parallel",),
        vmem_limit_bytes=_vmem_limit_bytes())


# ----------------------------------------------------------------------------
# In-kernel im2col: per-tap static lane roll + border mask -> bf16 patch.
# ----------------------------------------------------------------------------
def _im2col(patch_ref, mask_ref, x_f32, *, W, KH, KW, dil, cpad):
    """Write the (KH*KW*cpad, L) bf16 im2col patch of a (cpad, L) activation.

    Rolls are done in f32 on the XLU; the 0/1 mask implements 'same' padding
    and kills every wrap-around (row, image and block boundaries alike).  The
    activation already carries zero channel-pad rows, so every store is a
    full sublane-aligned (cpad, L) tile and the scratch never needs zeroing.
    (v7x alternative: skip the patch and accumulate 9 tap matmuls in the MRB.)
    """
    L = x_f32.shape[1]
    ph = dil * (KH - 1) // 2
    pw = dil * (KW - 1) // 2
    for kh in range(KH):
        for kw in range(KW):
            t = kh * KW + kw
            delta = (kh * dil - ph) * W + (kw * dil - pw)
            # shifted[q] = x[q + delta] (circular; wrap killed by the mask).
            shifted = x_f32 if delta == 0 else pltpu.roll(x_f32, (-delta) % L, 1)
            patch_ref[t * cpad:(t + 1) * cpad, :] = (
                shifted * mask_ref[t:t + 1, :]).astype(patch_ref.dtype)


# ----------------------------------------------------------------------------
# Kernels
# ----------------------------------------------------------------------------
def _conv_stats_kernel(x_ref, w_ref, mask_ref, y_ref, sum_ref, sq_ref,
                       patch_ref, *, W, KH, KW, dil, cpad):
    # conv1 (no bias; it cancels in the following BN) + per-block BN1 stats.
    _im2col(patch_ref, mask_ref, x_ref[...], W=W, KH=KH, KW=KW, dil=dil,
            cpad=cpad)
    y = jnp.dot(w_ref[...], patch_ref[...],
                preferred_element_type=jnp.float32)          # (CoP, L) f32
    y_ref[...] = y.astype(y_ref.dtype)                       # bf16 store
    sum_ref[0] = jnp.sum(y, axis=1, keepdims=True)           # (CoP, 1)
    sq_ref[0] = jnp.sum(y * y, axis=1, keepdims=True)


def _bn_relu_conv_stats_kernel(y1_ref, scale_ref, shift_ref, w_ref, mask_ref,
                               y2_ref, sum_ref, sq_ref, patch_ref, *,
                               W, KH, KW, dil, cpad):
    # BN1-apply + ReLU fused into the conv2 prologue (scale/shift precomputed).
    a = jnp.maximum(
        y1_ref[...].astype(jnp.float32) * scale_ref[...] + shift_ref[...], 0.0)
    _im2col(patch_ref, mask_ref, a, W=W, KH=KH, KW=KW, dil=dil, cpad=cpad)
    y = jnp.dot(w_ref[...], patch_ref[...],
                preferred_element_type=jnp.float32)          # (CoP, L) f32
    y2_ref[...] = y.astype(y2_ref.dtype)                     # bf16 store
    sum_ref[0] = jnp.sum(y, axis=1, keepdims=True)
    sq_ref[0] = jnp.sum(y * y, axis=1, keepdims=True)


def _bn_relu_kernel(y_ref, scale_ref, shift_ref, o_ref):
    # Final BN2-apply + ReLU; runs in place on y2 (input_output_aliases).
    o_ref[...] = jnp.maximum(
        y_ref[...].astype(jnp.float32) * scale_ref[...] + shift_ref[...],
        0.0).astype(o_ref.dtype)


# ----------------------------------------------------------------------------
# pallas_call wrappers
# ----------------------------------------------------------------------------
def _conv_stats(x, w2d, masks, *, L, W, KH, KW, dil, cpad):
    C, Ltot = x.shape
    CoP, K = w2d.shape
    nblk = Ltot // L
    kernel = functools.partial(_conv_stats_kernel, W=W, KH=KH, KW=KW, dil=dil,
                               cpad=cpad)
    return pl.pallas_call(
        kernel,
        out_shape=(jax.ShapeDtypeStruct((CoP, Ltot), jnp.bfloat16),
                   jax.ShapeDtypeStruct((nblk, CoP, 1), jnp.float32),
                   jax.ShapeDtypeStruct((nblk, CoP, 1), jnp.float32)),
        grid_spec=pltpu.PrefetchScalarGridSpec(
            num_scalar_prefetch=0,
            grid=(nblk,),
            in_specs=[
                pl.BlockSpec((C, L), lambda n: (0, n)),
                pl.BlockSpec((CoP, K), lambda n: (0, 0)),
                pl.BlockSpec((KH * KW, L), lambda n: (0, 0)),
            ],
            out_specs=(
                pl.BlockSpec((CoP, L), lambda n: (0, n)),
                pl.BlockSpec((1, CoP, 1), lambda n: (n, 0, 0)),
                pl.BlockSpec((1, CoP, 1), lambda n: (n, 0, 0)),
            ),
            scratch_shapes=[pltpu.VMEM((K, L), jnp.bfloat16)],
        ),
        compiler_params=_compiler_params(),
    )(x, w2d, masks)


def _bn_relu_conv_stats(y1, scale1, shift1, w2d, masks, *, L, W, KH, KW, dil,
                        cpad):
    Cm, Ltot = y1.shape
    CoP, K = w2d.shape
    nblk = Ltot // L
    kernel = functools.partial(_bn_relu_conv_stats_kernel, W=W, KH=KH, KW=KW,
                               dil=dil, cpad=cpad)
    return pl.pallas_call(
        kernel,
        out_shape=(jax.ShapeDtypeStruct((CoP, Ltot), jnp.bfloat16),
                   jax.ShapeDtypeStruct((nblk, CoP, 1), jnp.float32),
                   jax.ShapeDtypeStruct((nblk, CoP, 1), jnp.float32)),
        grid_spec=pltpu.PrefetchScalarGridSpec(
            num_scalar_prefetch=0,
            grid=(nblk,),
            in_specs=[
                pl.BlockSpec((Cm, L), lambda n: (0, n)),
                pl.BlockSpec((Cm, 1), lambda n: (0, 0)),
                pl.BlockSpec((Cm, 1), lambda n: (0, 0)),
                pl.BlockSpec((CoP, K), lambda n: (0, 0)),
                pl.BlockSpec((KH * KW, L), lambda n: (0, 0)),
            ],
            out_specs=(
                pl.BlockSpec((CoP, L), lambda n: (0, n)),
                pl.BlockSpec((1, CoP, 1), lambda n: (n, 0, 0)),
                pl.BlockSpec((1, CoP, 1), lambda n: (n, 0, 0)),
            ),
            scratch_shapes=[pltpu.VMEM((K, L), jnp.bfloat16)],
        ),
        compiler_params=_compiler_params(),
    )(y1, scale1, shift1, w2d, masks)


def _bn_relu_apply(y, scale, shift, *, L):
    C, Ltot = y.shape
    nblk = Ltot // L
    return pl.pallas_call(
        _bn_relu_kernel,
        out_shape=jax.ShapeDtypeStruct((C, Ltot), y.dtype),
        grid_spec=pltpu.PrefetchScalarGridSpec(
            num_scalar_prefetch=0,
            grid=(nblk,),
            in_specs=[
                pl.BlockSpec((C, L), lambda n: (0, n)),
                pl.BlockSpec((C, 1), lambda n: (0, 0)),
                pl.BlockSpec((C, 1), lambda n: (0, 0)),
            ],
            out_specs=pl.BlockSpec((C, L), lambda n: (0, n)),
        ),
        compiler_params=_compiler_params(),
        input_output_aliases={0: 0},          # finalize y2 in place
    )(y, scale, shift)


# ----------------------------------------------------------------------------
# Host-side packing / stats helpers (tiny, run under jit)
# ----------------------------------------------------------------------------
def _round_up(v, m):
    return (v + m - 1) // m * m


def _pack_weight(w_hwio, cin_pad, cout_pad):
    """(KH,KW,Cin,Cout) -> bf16 lane-dense (cout_pad, KH*KW*cin_pad) slab."""
    KH, KW, Cin, Cout = w_hwio.shape
    w = jnp.transpose(w_hwio, (3, 0, 1, 2))               # (Cout, KH, KW, Cin)
    w = jnp.pad(w, ((0, cout_pad - Cout), (0, 0), (0, 0), (0, cin_pad - Cin)))
    return w.reshape(cout_pad, KH * KW * cin_pad).astype(jnp.bfloat16)


def _border_masks(H, W, KH, KW, dil, NB):
    """(KH*KW, NB*H*W) 0/1 masks implementing 'same' padding (constants)."""
    ph = dil * (KH - 1) // 2
    pw = dil * (KW - 1) // 2
    HW = H * W
    q = np.arange(NB * HW)
    r = (q % HW) // W
    c = q % W
    masks = []
    for kh in range(KH):
        for kw in range(KW):
            dh = kh * dil - ph
            dw = kw * dil - pw
            masks.append((r + dh >= 0) & (r + dh < H) &
                         (c + dw >= 0) & (c + dw < W))
    return jnp.asarray(np.stack(masks, 0).astype(np.float32))


def _bn_scale_shift(psum, psq, count):
    """Training-mode BN scale/shift from per-block partial (sum, sumsq)."""
    mean = jnp.sum(psum, axis=0) / count                   # (C, 1)
    var = jnp.maximum(jnp.sum(psq, axis=0) / count - mean * mean, 0.0)
    scale = jax.lax.rsqrt(var + _EPS)
    return scale, -mean * scale


def _pick_batch_block(N, HW, k_rows):
    """Images per grid step.

    Largest divisor of N that (a) keeps the bf16 patch scratch + pipelined
    streams well inside the VMEM budget, (b) leaves >= 2 'parallel' grid
    steps when N >= 4 (feeds both v7x TensorCores), (c) keeps the lane axis
    128-aligned.  Production-size H*W would switch to H-strip tiling instead.
    """
    budget = _vmem_limit_bytes() // 2
    cap = N if N < 4 else min(8, N // 2)
    for nb in range(cap, 0, -1):
        if N % nb:
            continue
        L = nb * HW
        if nb != N and L % 128:
            continue
        if 2 * L * (k_rows + 8 * 16) <= budget:
            return nb
    return 1


# ----------------------------------------------------------------------------
# Module wrapper
# ----------------------------------------------------------------------------
def init_params(key, in_channels, out_channels, kernel_size):
    """Deterministic Conv2d init (uniform +/- 1/sqrt(fan_in), like PyTorch)."""
    k1, k2, k3, k4 = jax.random.split(key, 4)
    fan1 = in_channels * kernel_size * kernel_size
    fan2 = out_channels * kernel_size * kernel_size
    bound1 = 1.0 / float(np.sqrt(fan1))
    bound2 = 1.0 / float(np.sqrt(fan2))
    # weights stored as (KH, KW, Cin, Cout) (HWIO)
    w1 = jax.random.uniform(k1, (kernel_size, kernel_size, in_channels,
                                 out_channels), jnp.float32, -bound1, bound1)
    b1 = jax.random.uniform(k2, (out_channels,), jnp.float32, -bound1, bound1)
    w2 = jax.random.uniform(k3, (kernel_size, kernel_size, out_channels,
                                 out_channels), jnp.float32, -bound2, bound2)
    b2 = jax.random.uniform(k4, (out_channels,), jnp.float32, -bound2, bound2)
    return dict(w1=w1, b1=b1, w2=w2, b2=b2)


@jax.jit
def midscope_conv2d(x_nchw, params):
    """MidScopeConv2D forward.  Input/output in NCHW (PyTorch convention)."""
    N, Cin, H, W = x_nchw.shape
    HW = H * W
    w1, w2 = params["w1"], params["w2"]
    KH, KW, _, Cmid = w1.shape
    Cout = w2.shape[3]

    # bf16 patch tiles are (16, 128): pad channels to 16 so every im2col
    # store is a full unmasked tile and the zero pad rows ride along for free.
    cp_in = _round_up(Cin, 16)
    cp_mid = _round_up(Cmid, 16)
    cp_out = _round_up(Cout, 16)

    NB = _pick_batch_block(N, HW, KH * KW * max(cp_in, cp_mid))
    L = NB * HW
    count = float(N * HW)

    w1_2d = _pack_weight(w1, cp_in, cp_mid)
    w2_2d = _pack_weight(w2, cp_mid, cp_out)
    m1 = _border_masks(H, W, KH, KW, 1, NB)
    m2 = _border_masks(H, W, KH, KW, 2, NB)

    # NCHW -> channel-major (C, N*HW) with zero channel padding (one cheap XLA
    # transpose/pad; every Pallas block and store is then lane-dense).
    x = jnp.transpose(x_nchw.reshape(N, Cin, HW), (1, 0, 2)).reshape(Cin, N * HW)
    x = jnp.pad(x, ((0, cp_in - Cin), (0, 0)))

    # NOTE: conv biases (params['b1'], params['b2']) are intentionally unused:
    # a per-channel constant added right before a fresh training-mode
    # BatchNorm cancels exactly in the mean subtraction.
    y1, s1, q1 = _conv_stats(x, w1_2d, m1, L=L, W=W, KH=KH, KW=KW, dil=1,
                             cpad=cp_in)
    sc1, sh1 = _bn_scale_shift(s1, q1, count)
    y2, s2, q2 = _bn_relu_conv_stats(y1, sc1, sh1, w2_2d, m2, L=L, W=W, KH=KH,
                                     KW=KW, dil=2, cpad=cp_mid)
    sc2, sh2 = _bn_scale_shift(s2, q2, count)
    out = _bn_relu_apply(y2, sc2, sh2, L=L)                  # in place on y2

    out = out[:Cout].astype(jnp.float32).reshape(Cout, N, HW)
    return jnp.transpose(out, (1, 0, 2)).reshape(N, Cout, H, W)


# ----------------------------------------------------------------------------
# Pure-JAX f32 reference (with bias, demonstrating the exact cancellation)
# ----------------------------------------------------------------------------
def _ref_forward(x_nchw, params):
    def conv(x, w, b, d):
        y = jax.lax.conv_general_dilated(
            x, w, window_strides=(1, 1), padding="SAME",
            rhs_dilation=(d, d),
            dimension_numbers=("NHWC", "HWIO", "NHWC"))
        return y + b[None, None, None, :]

    def bn_relu(x):
        mean = jnp.mean(x, axis=(0, 1, 2), keepdims=True)
        var = jnp.mean((x - mean) ** 2, axis=(0, 1, 2), keepdims=True)
        return jnp.maximum((x - mean) / jnp.sqrt(var + _EPS), 0.0)

    x = jnp.transpose(x_nchw, (0, 2, 3, 1))
    x = bn_relu(conv(x, params["w1"], params["b1"], 1))
    x = bn_relu(conv(x, params["w2"], params["b2"], 2))
    return jnp.transpose(x, (0, 3, 1, 2))


if __name__ == "__main__":
    key = jax.random.PRNGKey(0)
    k_x, k_p = jax.random.split(key)

    N, Cin, Cout, S, K = 2, 4, 8, 16, 3
    x = jax.random.normal(k_x, (N, Cin, S, S), jnp.float32)
    params = init_params(k_p, Cin, Cout, K)

    out = jax.block_until_ready(midscope_conv2d(x, params))
    ref = _ref_forward(x, params)

    assert out.shape == (N, Cout, S, S), out.shape
    # bf16 MXU operands + bf16 inter-pass intermediates vs. a pure-f32
    # reference -> bf16-level tolerance (errors are ~0.5-1% after two BNs).
    err = float(jnp.max(jnp.abs(out - ref)))
    assert jnp.allclose(out, ref, rtol=5e-2, atol=5e-2), err

    print("KERNEL_OK")
</pallas_src>

<mosaic_0001>
module attributes {stable_mosaic.version = 11 : i64} {
  func.func @_conv_stats_kernel(%arg0: i32, %arg1: memref<16x512xf32, #tpu.memory_space<vmem>>, %arg2: memref<16x144xbf16, #tpu.memory_space<vmem>>, %arg3: memref<9x512xf32, #tpu.memory_space<vmem>>, %arg4: memref<16x512xbf16, #tpu.memory_space<vmem>>, %arg5: memref<1x16x1xf32, #tpu.memory_space<vmem>>, %arg6: memref<1x16x1xf32, #tpu.memory_space<vmem>>, %arg7: memref<144x512xbf16, #tpu.memory_space<vmem>>) attributes {dimension_semantics = [#tpu.dimension_semantics<parallel>], iteration_bounds = array<i64: 1>, scalar_prefetch = 0 : i64, scratch_operands = 1 : i64, tpu.core_type = #tpu.core_type<tc>, window_params = [{transform_indices = @transform_0, window_bounds = array<i64: 16, 512>}, {pipeline_mode = #tpu.pipeline_mode<synchronous>, transform_indices = @transform_1, window_bounds = array<i64: 16, 144>}, {pipeline_mode = #tpu.pipeline_mode<synchronous>, transform_indices = @transform_2, window_bounds = array<i64: 9, 512>}, {transform_indices = @transform_3, window_bounds = array<i64: 16, 512>}, {transform_indices = @transform_4, window_bounds = array<i64: 1, 16, 1>}, {transform_indices = @transform_5, window_bounds = array<i64: 1, 16, 1>}]} {
    %c0 = arith.constant 0 : index
    %c0_0 = arith.constant 0 : index
    %0 = vector.load %arg1[%c0, %c0_0] : memref<16x512xf32, #tpu.memory_space<vmem>>, vector<16x512xf32>
    %c17_i32 = arith.constant 17 : i32
    %1 = tpu.dynamic_rotate %0 by %c17_i32 dim 1 : vector<16x512xf32>, i32 -> vector<16x512xf32>
    %c0_1 = arith.constant 0 : index
    %c0_2 = arith.constant 0 : index
    %2 = vector.load %arg3[%c0_1, %c0_2] : memref<9x512xf32, #tpu.memory_space<vmem>>, vector<1x512xf32>
    %3 = vector.broadcast %2 : vector<1x512xf32> to vector<16x512xf32>
    %4 = arith.mulf %1, %3 : vector<16x512xf32>
    %5 = arith.truncf %4 : vector<16x512xf32> to vector<16x512xbf16>
    %c0_3 = arith.constant 0 : index
    %c0_4 = arith.constant 0 : index
    %6 = vector.load %arg7[%c0_3, %c0_4] : memref<144x512xbf16, #tpu.memory_space<vmem>>, vector<16x512xbf16>
    tpu.vector_store %arg7[%c0_3, %c0_4], %5 {strides = array<i32>} : memref<144x512xbf16, #tpu.memory_space<vmem>>, vector<16x512xbf16>,
    %c16_i32 = arith.constant 16 : i32
    %7 = tpu.dynamic_rotate %0 by %c16_i32 dim 1 : vector<16x512xf32>, i32 -> vector<16x512xf32>
    %c1 = arith.constant 1 : index
    %c0_5 = arith.constant 0 : index
    %8 = vector.load %arg3[%c1, %c0_5] : memref<9x512xf32, #tpu.memory_space<vmem>>, vector<1x512xf32>
    %9 = vector.broadcast %8 : vector<1x512xf32> to vector<16x512xf32>
    %10 = arith.mulf %7, %9 : vector<16x512xf32>
    %11 = arith.truncf %10 : vector<16x512xf32> to vector<16x512xbf16>
    %c16 = arith.constant 16 : index
    %c0_6 = arith.constant 0 : index
    %12 = vector.load %arg7[%c16, %c0_6] : memref<144x512xbf16, #tpu.memory_space<vmem>>, vector<16x512xbf16>
    tpu.vector_store %arg7[%c16, %c0_6], %11 {strides = array<i32>} : memref<144x512xbf16, #tpu.memory_space<vmem>>, vector<16x512xbf16>,
    %c15_i32 = arith.constant 15 : i32
    %13 = tpu.dynamic_rotate %0 by %c15_i32 dim 1 : vector<16x512xf32>, i32 -> vector<16x512xf32>
    %c2 = arith.constant 2 : index
    %c0_7 = arith.constant 0 : index
    %14 = vector.load %arg3[%c2, %c0_7] : memref<9x512xf32, #tpu.memory_space<vmem>>, vector<1x512xf32>
    %15 = vector.broadcast %14 : vector<1x512xf32> to vector<16x512xf32>
    %16 = arith.mulf %13, %15 : vector<16x512xf32>
    %17 = arith.truncf %16 : vector<16x512xf32> to vector<16x512xbf16>
    %c32 = arith.constant 32 : index
    %c0_8 = arith.constant 0 : index
    %18 = vector.load %arg7[%c32, %c0_8] : memref<144x512xbf16, #tpu.memory_space<vmem>>, vector<16x512xbf16>
    tpu.vector_store %arg7[%c32, %c0_8], %17 {strides = array<i32>} : memref<144x512xbf16, #tpu.memory_space<vmem>>, vector<16x512xbf16>,
    %c1_i32 = arith.constant 1 : i32
    %19 = tpu.dynamic_rotate %0 by %c1_i32 dim 1 : vector<16x512xf32>, i32 -> vector<16x512xf32>
    %c3 = arith.constant 3 : index
    %c0_9 = arith.constant 0 : index
    %20 = vector.load %arg3[%c3, %c0_9] : memref<9x512xf32, #tpu.memory_space<vmem>>, vector<1x512xf32>
    %21 = vector.broadcast %20 : vector<1x512xf32> to vector<16x512xf32>
    %22 = arith.mulf %19, %21 : vector<16x512xf32>
    %23 = arith.truncf %22 : vector<16x512xf32> to vector<16x512xbf16>
    %c48 = arith.constant 48 : index
    %c0_10 = arith.constant 0 : index
    %24 = vector.load %arg7[%c48, %c0_10] : memref<144x512xbf16, #tpu.memory_space<vmem>>, vector<16x512xbf16>
    tpu.vector_store %arg7[%c48, %c0_10], %23 {strides = array<i32>} : memref<144x512xbf16, #tpu.memory_space<vmem>>, vector<16x512xbf16>,
    %c4 = arith.constant 4 : index
    %c0_11 = arith.constant 0 : index
    %25 = vector.load %arg3[%c4, %c0_11] : memref<9x512xf32, #tpu.memory_space<vmem>>, vector<1x512xf32>
    %26 = vector.broadcast %25 : vector<1x512xf32> to vector<16x512xf32>
    %27 = arith.mulf %0, %26 : vector<16x512xf32>
    %28 = arith.truncf %27 : vector<16x512xf32> to vector<16x512xbf16>
    %c64 = arith.constant 64 : index
    %c0_12 = arith.constant 0 : index
    %29 = vector.load %arg7[%c64, %c0_12] : memref<144x512xbf16, #tpu.memory_space<vmem>>, vector<16x512xbf16>
    tpu.vector_store %arg7[%c64, %c0_12], %28 {strides = array<i32>} : memref<144x512xbf16, #tpu.memory_space<vmem>>, vector<16x512xbf16>,
    %c511_i32 = arith.constant 511 : i32
    %30 = tpu.dynamic_rotate %0 by %c511_i32 dim 1 : vector<16x512xf32>, i32 -> vector<16x512xf32>
    %c5 = arith.constant 5 : index
    %c0_13 = arith.constant 0 : index
    %31 = vector.load %arg3[%c5, %c0_13] : memref<9x512xf32, #tpu.memory_space<vmem>>, vector<1x512xf32>
    %32 = vector.broadcast %31 : vector<1x512xf32> to vector<16x512xf32>
    %33 = arith.mulf %30, %32 : vector<16x512xf32>
    %34 = arith.truncf %33 : vector<16x512xf32> to vector<16x512xbf16>
    %c80 = arith.constant 80 : index
    %c0_14 = arith.constant 0 : index
    %35 = vector.load %arg7[%c80, %c0_14] : memref<144x512xbf16, #tpu.memory_space<vmem>>, vector<16x512xbf16>
    tpu.vector_store %arg7[%c80, %c0_14], %34 {strides = array<i32>} : memref<144x512xbf16, #tpu.memory_space<vmem>>, vector<16x512xbf16>,
    %c497_i32 = arith.constant 497 : i32
    %36 = tpu.dynamic_rotate %0 by %c497_i32 dim 1 : vector<16x512xf32>, i32 -> vector<16x512xf32>
    %c6 = arith.constant 6 : index
    %c0_15 = arith.constant 0 : index
    %37 = vector.load %arg3[%c6, %c0_15] : memref<9x512xf32, #tpu.memory_space<vmem>>, vector<1x512xf32>
    %38 = vector.broadcast %37 : vector<1x512xf32> to vector<16x512xf32>
    %39 = arith.mulf %36, %38 : vector<16x512xf32>
    %40 = arith.truncf %39 : vector<16x512xf32> to vector<16x512xbf16>
    %c96 = arith.constant 96 : index
    %c0_16 = arith.constant 0 : index
    %41 = vector.load %arg7[%c96, %c0_16] : memref<144x512xbf16, #tpu.memory_space<vmem>>, vector<16x512xbf16>
    tpu.vector_store %arg7[%c96, %c0_16], %40 {strides = array<i32>} : memref<144x512xbf16, #tpu.memory_space<vmem>>, vector<16x512xbf16>,
    %c496_i32 = arith.constant 496 : i32
    %42 = tpu.dynamic_rotate %0 by %c496_i32 dim 1 : vector<16x512xf32>, i32 -> vector<16x512xf32>
    %c7 = arith.constant 7 : index
    %c0_17 = arith.constant 0 : index
    %43 = vector.load %arg3[%c7, %c0_17] : memref<9x512xf32, #tpu.memory_space<vmem>>, vector<1x512xf32>
    %44 = vector.broadcast %43 : vector<1x512xf32> to vector<16x512xf32>
    %45 = arith.mulf %42, %44 : vector<16x512xf32>
    %46 = arith.truncf %45 : vector<16x512xf32> to vector<16x512xbf16>
    %c112 = arith.constant 112 : index
    %c0_18 = arith.constant 0 : index
    %47 = vector.load %arg7[%c112, %c0_18] : memref<144x512xbf16, #tpu.memory_space<vmem>>, vector<16x512xbf16>
    tpu.vector_store %arg7[%c112, %c0_18], %46 {strides = array<i32>} : memref<144x512xbf16, #tpu.memory_space<vmem>>, vector<16x512xbf16>,
    %c495_i32 = arith.constant 495 : i32
    %48 = tpu.dynamic_rotate %0 by %c495_i32 dim 1 : vector<16x512xf32>, i32 -> vector<16x512xf32>
    %c8 = arith.constant 8 : index
    %c0_19 = arith.constant 0 : index
    %49 = vector.load %arg3[%c8, %c0_19] : memref<9x512xf32, #tpu.memory_space<vmem>>, vector<1x512xf32>
    %50 = vector.broadcast %49 : vector<1x512xf32> to vector<16x512xf32>
    %51 = arith.mulf %48, %50 : vector<16x512xf32>
    %52 = arith.truncf %51 : vector<16x512xf32> to vector<16x512xbf16>
    %c128 = arith.constant 128 : index
    %c0_20 = arith.constant 0 : index
    %53 = vector.load %arg7[%c128, %c0_20] : memref<144x512xbf16, #tpu.memory_space<vmem>>, vector<16x512xbf16>
    tpu.vector_store %arg7[%c128, %c0_20], %52 {strides = array<i32>} : memref<144x512xbf16, #tpu.memory_space<vmem>>, vector<16x512xbf16>,
    %c0_21 = arith.constant 0 : index
    %c0_22 = arith.constant 0 : index
    %54 = vector.load %arg2[%c0_21, %c0_22] : memref<16x144xbf16, #tpu.memory_space<vmem>>, vector<16x144xbf16>
    %c0_23 = arith.constant 0 : index
    %c0_24 = arith.constant 0 : index
    %55 = vector.load %arg7[%c0_23, %c0_24] : memref<144x512xbf16, #tpu.memory_space<vmem>>, vector<144x512xbf16>
    %cst = arith.constant dense<0.000000e+00> : vector<16x512xf32>
    %56 = tpu.matmul %54, %55, %cst {dimension_numbers = #tpu.dot_dimension_numbers<[1], [0], [0], [1], [0, 0, 1, 1], [], []>} : vector<16x144xbf16>, vector<144x512xbf16>, vector<16x512xf32> -> vector<16x512xf32>
    %57 = arith.truncf %56 : vector<16x512xf32> to vector<16x512xbf16>
    %c0_25 = arith.constant 0 : index
    %c0_26 = arith.constant 0 : index
    %58 = vector.load %arg4[%c0_25, %c0_26] : memref<16x512xbf16, #tpu.memory_space<vmem>>, vector<16x512xbf16>
    tpu.vector_store %arg4[%c0_25, %c0_26], %57 {strides = array<i32>} : memref<16x512xbf16, #tpu.memory_space<vmem>>, vector<16x512xbf16>,
    %cst_27 = arith.constant dense<0.000000e+00> : vector<16xf32>
    %59 = vector.multi_reduction <add>, %56, %cst_27 [1] : vector<16x512xf32> to vector<16xf32>
    %60 = vector.shape_cast %59 : vector<16xf32> to vector<16x1xf32>
    %c0_28 = arith.constant 0 : index
    %c0_29 = arith.constant 0 : index
    %c0_30 = arith.constant 0 : index
    %61 = vector.load %arg5[%c0_28, %c0_29, %c0_30] : memref<1x16x1xf32, #tpu.memory_space<vmem>>, vector<1x16x1xf32>
    %62 = vector.shape_cast %61 : vector<1x16x1xf32> to vector<16x1xf32>
    %63 = vector.shape_cast %60 : vector<16x1xf32> to vector<1x16x1xf32>
    tpu.vector_store %arg5[%c0_28, %c0_29, %c0_30], %63 {strides = array<i32>} : memref<1x16x1xf32, #tpu.memory_space<vmem>>, vector<1x16x1xf32>,
    %64 = arith.mulf %56, %56 : vector<16x512xf32>
    %cst_31 = arith.constant dense<0.000000e+00> : vector<16xf32>
    %65 = vector.multi_reduction <add>, %64, %cst_31 [1] : vector<16x512xf32> to vector<16xf32>
    %66 = vector.shape_cast %65 : vector<16xf32> to vector<16x1xf32>
    %c0_32 = arith.constant 0 : index
    %c0_33 = arith.constant 0 : index
    %c0_34 = arith.constant 0 : index
    %67 = vector.load %arg6[%c0_32, %c0_33, %c0_34] : memref<1x16x1xf32, #tpu.memory_space<vmem>>, vector<1x16x1xf32>
    %68 = vector.shape_cast %67 : vector<1x16x1xf32> to vector<16x1xf32>
    %69 = vector.shape_cast %66 : vector<16x1xf32> to vector<1x16x1xf32>
    tpu.vector_store %arg6[%c0_32, %c0_33, %c0_34], %69 {strides = array<i32>} : memref<1x16x1xf32, #tpu.memory_space<vmem>>, vector<1x16x1xf32>,
    return
  }
  func.func @transform_0(%arg0: i32) -> (i32, i32) {
    %c0_i32 = arith.constant 0 : i32
    %c0_i32_0 = arith.constant 0 : i32
    return %c0_i32, %arg0 : i32, i32
  }
  func.func @transform_1(%arg0: i32) -> (i32, i32) {
    %c0_i32 = arith.constant 0 : i32
    %c0_i32_0 = arith.constant 0 : i32
    %c0_i32_1 = arith.constant 0 : i32
    return %c0_i32, %c0_i32_0 : i32, i32
  }
  func.func @transform_2(%arg0: i32) -> (i32, i32) {
    %c0_i32 = arith.constant 0 : i32
    %c0_i32_0 = arith.constant 0 : i32
    %c0_i32_1 = arith.constant 0 : i32
    return %c0_i32, %c0_i32_0 : i32, i32
  }
  func.func @transform_3(%arg0: i32) -> (i32, i32) {
    %c0_i32 = arith.constant 0 : i32
    %c0_i32_0 = arith.constant 0 : i32
    return %c0_i32, %arg0 : i32, i32
  }
  func.func @transform_4(%arg0: i32) -> (i32, i32, i32) {
    %c0_i32 = arith.constant 0 : i32
    %c0_i32_0 = arith.constant 0 : i32
    %c0_i32_1 = arith.constant 0 : i32
    return %arg0, %c0_i32, %c0_i32_0 : i32, i32, i32
  }
  func.func @transform_5(%arg0: i32) -> (i32, i32, i32) {
    %c0_i32 = arith.constant 0 : i32
    %c0_i32_0 = arith.constant 0 : i32
    %c0_i32_1 = arith.constant 0 : i32
    return %arg0, %c0_i32, %c0_i32_0 : i32, i32, i32
  }
}

module attributes {stable_mosaic.version = 11 : i64} {
  func.func @_bn_relu_kernel(%arg0: i32, %arg1: memref<16x512xbf16, #tpu.memory_space<vmem>>, %arg2: memref<16x1xf32, #tpu.memory_space<vmem>>, %arg3: memref<16x1xf32, #tpu.memory_space<vmem>>, %arg4: memref<16x512xbf16, #tpu.memory_space<vmem>>) attributes {dimension_semantics = [#tpu.dimension_semantics<parallel>], iteration_bounds = array<i64: 1>, scalar_prefetch = 0 : i64, scratch_operands = 0 : i64, tpu.core_type = #tpu.core_type<tc>, window_params = [{transform_indices = @transform_0, window_bounds = array<i64: 16, 512>}, {pipeline_mode = #tpu.pipeline_mode<synchronous>, transform_indices = @transform_1, window_bounds = array<i64: 16, 1>}, {pipeline_mode = #tpu.pipeline_mode<synchronous>, transform_indices = @transform_2, window_bounds = array<i64: 16, 1>}, {transform_indices = @transform_3, window_bounds = array<i64: 16, 512>}]} {
    %c0 = arith.constant 0 : index
    %c0_0 = arith.constant 0 : index
    %0 = vector.load %arg1[%c0, %c0_0] : memref<16x512xbf16, #tpu.memory_space<vmem>>, vector<16x512xbf16>
    %1 = arith.extf %0 : vector<16x512xbf16> to vector<16x512xf32>
    %c0_1 = arith.constant 0 : index
    %c0_2 = arith.constant 0 : index
    %2 = vector.load %arg2[%c0_1, %c0_2] : memref<16x1xf32, #tpu.memory_space<vmem>>, vector<16x1xf32>
    %3 = vector.broadcast %2 : vector<16x1xf32> to vector<16x512xf32>
    %4 = arith.mulf %1, %3 : vector<16x512xf32>
    %c0_3 = arith.constant 0 : index
    %c0_4 = arith.constant 0 : index
    %5 = vector.load %arg3[%c0_3, %c0_4] : memref<16x1xf32, #tpu.memory_space<vmem>>, vector<16x1xf32>
    %6 = vector.broadcast %5 : vector<16x1xf32> to vector<16x512xf32>
    %7 = arith.addf %4, %6 : vector<16x512xf32>
    %cst = arith.constant 0.000000e+00 : f32
    %8 = vector.broadcast %cst : f32 to vector<16x512xf32>
    %9 = arith.maximumf %7, %8 : vector<16x512xf32>
    %10 = arith.truncf %9 : vector<16x512xf32> to vector<16x512xbf16>
    %c0_5 = arith.constant 0 : index
    %c0_6 = arith.constant 0 : index
    %11 = vector.load %arg4[%c0_5, %c0_6] : memref<16x512xbf16, #tpu.memory_space<vmem>>, vector<16x512xbf16>
    tpu.vector_store %arg4[%c0_5, %c0_6], %10 {strides = array<i32>} : memref<16x512xbf16, #tpu.memory_space<vmem>>, vector<16x512xbf16>,
    return
  }
  func.func @transform_0(%arg0: i32) -> (i32, i32) {
    %c0_i32 = arith.constant 0 : i32
    %c0_i32_0 = arith.constant 0 : i32
    return %c0_i32, %arg0 : i32, i32
  }
  func.func @transform_1(%arg0: i32) -> (i32, i32) {
    %c0_i32 = arith.constant 0 : i32
    %c0_i32_0 = arith.constant 0 : i32
    %c0_i32_1 = arith.constant 0 : i32
    return %c0_i32, %c0_i32_0 : i32, i32
  }
  func.func @transform_2(%arg0: i32) -> (i32, i32) {
    %c0_i32 = arith.constant 0 : i32
    %c0_i32_0 = arith.constant 0 : i32
    %c0_i32_1 = arith.constant 0 : i32
    return %c0_i32, %c0_i32_0 : i32, i32
  }
  func.func @transform_3(%arg0: i32) -> (i32, i32) {
    %c0_i32 = arith.constant 0 : i32
    %c0_i32_0 = arith.constant 0 : i32
    return %c0_i32, %arg0 : i32, i32
  }
}

module attributes {stable_mosaic.version = 11 : i64} {
  func.func @_bn_relu_conv_stats_kernel(%arg0: i32, %arg1: memref<16x512xbf16, #tpu.memory_space<vmem>>, %arg2: memref<16x1xf32, #tpu.memory_space<vmem>>, %arg3: memref<16x1xf32, #tpu.memory_space<vmem>>, %arg4: memref<16x144xbf16, #tpu.memory_space<vmem>>, %arg5: memref<9x512xf32, #tpu.memory_space<vmem>>, %arg6: memref<16x512xbf16, #tpu.memory_space<vmem>>, %arg7: memref<1x16x1xf32, #tpu.memory_space<vmem>>, %arg8: memref<1x16x1xf32, #tpu.memory_space<vmem>>, %arg9: memref<144x512xbf16, #tpu.memory_space<vmem>>) attributes {dimension_semantics = [#tpu.dimension_semantics<parallel>], iteration_bounds = array<i64: 1>, scalar_prefetch = 0 : i64, scratch_operands = 1 : i64, tpu.core_type = #tpu.core_type<tc>, window_params = [{transform_indices = @transform_0, window_bounds = array<i64: 16, 512>}, {pipeline_mode = #tpu.pipeline_mode<synchronous>, transform_indices = @transform_1, window_bounds = array<i64: 16, 1>}, {pipeline_mode = #tpu.pipeline_mode<synchronous>, transform_indices = @transform_2, window_bounds = array<i64: 16, 1>}, {pipeline_mode = #tpu.pipeline_mode<synchronous>, transform_indices = @transform_3, window_bounds = array<i64: 16, 144>}, {pipeline_mode = #tpu.pipeline_mode<synchronous>, transform_indices = @transform_4, window_bounds = array<i64: 9, 512>}, {transform_indices = @transform_5, window_bounds = array<i64: 16, 512>}, {transform_indices = @transform_6, window_bounds = array<i64: 1, 16, 1>}, {transform_indices = @transform_7, window_bounds = array<i64: 1, 16, 1>}]} {
    %c0 = arith.constant 0 : index
    %c0_0 = arith.constant 0 : index
    %0 = vector.load %arg1[%c0, %c0_0] : memref<16x512xbf16, #tpu.memory_space<vmem>>, vector<16x512xbf16>
    %1 = arith.extf %0 : vector<16x512xbf16> to vector<16x512xf32>
    %c0_1 = arith.constant 0 : index
    %c0_2 = arith.constant 0 : index
    %2 = vector.load %arg2[%c0_1, %c0_2] : memref<16x1xf32, #tpu.memory_space<vmem>>, vector<16x1xf32>
    %3 = vector.broadcast %2 : vector<16x1xf32> to vector<16x512xf32>
    %4 = arith.mulf %1, %3 : vector<16x512xf32>
    %c0_3 = arith.constant 0 : index
    %c0_4 = arith.constant 0 : index
    %5 = vector.load %arg3[%c0_3, %c0_4] : memref<16x1xf32, #tpu.memory_space<vmem>>, vector<16x1xf32>
    %6 = vector.broadcast %5 : vector<16x1xf32> to vector<16x512xf32>
    %7 = arith.addf %4, %6 : vector<16x512xf32>
    %cst = arith.constant 0.000000e+00 : f32
    %8 = vector.broadcast %cst : f32 to vector<16x512xf32>
    %9 = arith.maximumf %7, %8 : vector<16x512xf32>
    %c34_i32 = arith.constant 34 : i32
    %10 = tpu.dynamic_rotate %9 by %c34_i32 dim 1 : vector<16x512xf32>, i32 -> vector<16x512xf32>
    %c0_5 = arith.constant 0 : index
    %c0_6 = arith.constant 0 : index
    %11 = vector.load %arg5[%c0_5, %c0_6] : memref<9x512xf32, #tpu.memory_space<vmem>>, vector<1x512xf32>
    %12 = vector.broadcast %11 : vector<1x512xf32> to vector<16x512xf32>
    %13 = arith.mulf %10, %12 : vector<16x512xf32>
    %14 = arith.truncf %13 : vector<16x512xf32> to vector<16x512xbf16>
    %c0_7 = arith.constant 0 : index
    %c0_8 = arith.constant 0 : index
    %15 = vector.load %arg9[%c0_7, %c0_8] : memref<144x512xbf16, #tpu.memory_space<vmem>>, vector<16x512xbf16>
    tpu.vector_store %arg9[%c0_7, %c0_8], %14 {strides = array<i32>} : memref<144x512xbf16, #tpu.memory_space<vmem>>, vector<16x512xbf16>,
    %c32_i32 = arith.constant 32 : i32
    %16 = tpu.dynamic_rotate %9 by %c32_i32 dim 1 : vector<16x512xf32>, i32 -> vector<16x512xf32>
    %c1 = arith.constant 1 : index
    %c0_9 = arith.constant 0 : index
    %17 = vector.load %arg5[%c1, %c0_9] : memref<9x512xf32, #tpu.memory_space<vmem>>, vector<1x512xf32>
    %18 = vector.broadcast %17 : vector<1x512xf32> to vector<16x512xf32>
    %19 = arith.mulf %16, %18 : vector<16x512xf32>
    %20 = arith.truncf %19 : vector<16x512xf32> to vector<16x512xbf16>
    %c16 = arith.constant 16 : index
    %c0_10 = arith.constant 0 : index
    %21 = vector.load %arg9[%c16, %c0_10] : memref<144x512xbf16, #tpu.memory_space<vmem>>, vector<16x512xbf16>
    tpu.vector_store %arg9[%c16, %c0_10], %20 {strides = array<i32>} : memref<144x512xbf16, #tpu.memory_space<vmem>>, vector<16x512xbf16>,
    %c30_i32 = arith.constant 30 : i32
    %22 = tpu.dynamic_rotate %9 by %c30_i32 dim 1 : vector<16x512xf32>, i32 -> vector<16x512xf32>
    %c2 = arith.constant 2 : index
    %c0_11 = arith.constant 0 : index
    %23 = vector.load %arg5[%c2, %c0_11] : memref<9x512xf32, #tpu.memory_space<vmem>>, vector<1x512xf32>
    %24 = vector.broadcast %23 : vector<1x512xf32> to vector<16x512xf32>
    %25 = arith.mulf %22, %24 : vector<16x512xf32>
    %26 = arith.truncf %25 : vector<16x512xf32> to vector<16x512xbf16>
    %c32 = arith.constant 32 : index
    %c0_12 = arith.constant 0 : index
    %27 = vector.load %arg9[%c32, %c0_12] : memref<144x512xbf16, #tpu.memory_space<vmem>>, vector<16x512xbf16>
    tpu.vector_store %arg9[%c32, %c0_12], %26 {strides = array<i32>} : memref<144x512xbf16, #tpu.memory_space<vmem>>, vector<16x512xbf16>,
    %c2_i32 = arith.constant 2 : i32
    %28 = tpu.dynamic_rotate %9 by %c2_i32 dim 1 : vector<16x512xf32>, i32 -> vector<16x512xf32>
    %c3 = arith.constant 3 : index
    %c0_13 = arith.constant 0 : index
    %29 = vector.load %arg5[%c3, %c0_13] : memref<9x512xf32, #tpu.memory_space<vmem>>, vector<1x512xf32>
    %30 = vector.broadcast %29 : vector<1x512xf32> to vector<16x512xf32>
    %31 = arith.mulf %28, %30 : vector<16x512xf32>
    %32 = arith.truncf %31 : vector<16x512xf32> to vector<16x512xbf16>
    %c48 = arith.constant 48 : index
    %c0_14 = arith.constant 0 : index
    %33 = vector.load %arg9[%c48, %c0_14] : memref<144x512xbf16, #tpu.memory_space<vmem>>, vector<16x512xbf16>
    tpu.vector_store %arg9[%c48, %c0_14], %32 {strides = array<i32>} : memref<144x512xbf16, #tpu.memory_space<vmem>>, vector<16x512xbf16>,
    %c4 = arith.constant 4 : index
    %c0_15 = arith.constant 0 : index
    %34 = vector.load %arg5[%c4, %c0_15] : memref<9x512xf32, #tpu.memory_space<vmem>>, vector<1x512xf32>
    %35 = vector.broadcast %34 : vector<1x512xf32> to vector<16x512xf32>
    %36 = arith.mulf %9, %35 : vector<16x512xf32>
    %37 = arith.truncf %36 : vector<16x512xf32> to vector<16x512xbf16>
    %c64 = arith.constant 64 : index
    %c0_16 = arith.constant 0 : index
    %38 = vector.load %arg9[%c64, %c0_16] : memref<144x512xbf16, #tpu.memory_space<vmem>>, vector<16x512xbf16>
    tpu.vector_store %arg9[%c64, %c0_16], %37 {strides = array<i32>} : memref<144x512xbf16, #tpu.memory_space<vmem>>, vector<16x512xbf16>,
    %c510_i32 = arith.constant 510 : i32
    %39 = tpu.dynamic_rotate %9 by %c510_i32 dim 1 : vector<16x512xf32>, i32 -> vector<16x512xf32>
    %c5 = arith.constant 5 : index
    %c0_17 = arith.constant 0 : index
    %40 = vector.load %arg5[%c5, %c0_17] : memref<9x512xf32, #tpu.memory_space<vmem>>, vector<1x512xf32>
    %41 = vector.broadcast %40 : vector<1x512xf32> to vector<16x512xf32>
    %42 = arith.mulf %39, %41 : vector<16x512xf32>
    %43 = arith.truncf %42 : vector<16x512xf32> to vector<16x512xbf16>
    %c80 = arith.constant 80 : index
    %c0_18 = arith.constant 0 : index
    %44 = vector.load %arg9[%c80, %c0_18] : memref<144x512xbf16, #tpu.memory_space<vmem>>, vector<16x512xbf16>
    tpu.vector_store %arg9[%c80, %c0_18], %43 {strides = array<i32>} : memref<144x512xbf16, #tpu.memory_space<vmem>>, vector<16x512xbf16>,
    %c482_i32 = arith.constant 482 : i32
    %45 = tpu.dynamic_rotate %9 by %c482_i32 dim 1 : vector<16x512xf32>, i32 -> vector<16x512xf32>
    %c6 = arith.constant 6 : index
    %c0_19 = arith.constant 0 : index
    %46 = vector.load %arg5[%c6, %c0_19] : memref<9x512xf32, #tpu.memory_space<vmem>>, vector<1x512xf32>
    %47 = vector.broadcast %46 : vector<1x512xf32> to vector<16x512xf32>
    %48 = arith.mulf %45, %47 : vector<16x512xf32>
    %49 = arith.truncf %48 : vector<16x512xf32> to vector<16x512xbf16>
    %c96 = arith.constant 96 : index
    %c0_20 = arith.constant 0 : index
    %50 = vector.load %arg9[%c96, %c0_20] : memref<144x512xbf16, #tpu.memory_space<vmem>>, vector<16x512xbf16>
    tpu.vector_store %arg9[%c96, %c0_20], %49 {strides = array<i32>} : memref<144x512xbf16, #tpu.memory_space<vmem>>, vector<16x512xbf16>,
    %c480_i32 = arith.constant 480 : i32
    %51 = tpu.dynamic_rotate %9 by %c480_i32 dim 1 : vector<16x512xf32>, i32 -> vector<16x512xf32>
    %c7 = arith.constant 7 : index
    %c0_21 = arith.constant 0 : index
    %52 = vector.load %arg5[%c7, %c0_21] : memref<9x512xf32, #tpu.memory_space<vmem>>, vector<1x512xf32>
    %53 = vector.broadcast %52 : vector<1x512xf32> to vector<16x512xf32>
    %54 = arith.mulf %51, %53 : vector<16x512xf32>
    %55 = arith.truncf %54 : vector<16x512xf32> to vector<16x512xbf16>
    %c112 = arith.constant 112 : index
    %c0_22 = arith.constant 0 : index
    %56 = vector.load %arg9[%c112, %c0_22] : memref<144x512xbf16, #tpu.memory_space<vmem>>, vector<16x512xbf16>
    tpu.vector_store %arg9[%c112, %c0_22], %55 {strides = array<i32>} : memref<144x512xbf16, #tpu.memory_space<vmem>>, vector<16x512xbf16>,
    %c478_i32 = arith.constant 478 : i32
    %57 = tpu.dynamic_rotate %9 by %c478_i32 dim 1 : vector<16x512xf32>, i32 -> vector<16x512xf32>
    %c8 = arith.constant 8 : index
    %c0_23 = arith.constant 0 : index
    %58 = vector.load %arg5[%c8, %c0_23] : memref<9x512xf32, #tpu.memory_space<vmem>>, vector<1x512xf32>
    %59 = vector.broadcast %58 : vector<1x512xf32> to vector<16x512xf32>
    %60 = arith.mulf %57, %59 : vector<16x512xf32>
    %61 = arith.truncf %60 : vector<16x512xf32> to vector<16x512xbf16>
    %c128 = arith.constant 128 : index
    %c0_24 = arith.constant 0 : index
    %62 = vector.load %arg9[%c128, %c0_24] : memref<144x512xbf16, #tpu.memory_space<vmem>>, vector<16x512xbf16>
    tpu.vector_store %arg9[%c128, %c0_24], %61 {strides = array<i32>} : memref<144x512xbf16, #tpu.memory_space<vmem>>, vector<16x512xbf16>,
    %c0_25 = arith.constant 0 : index
    %c0_26 = arith.constant 0 : index
    %63 = vector.load %arg4[%c0_25, %c0_26] : memref<16x144xbf16, #tpu.memory_space<vmem>>, vector<16x144xbf16>
    %c0_27 = arith.constant 0 : index
    %c0_28 = arith.constant 0 : index
    %64 = vector.load %arg9[%c0_27, %c0_28] : memref<144x512xbf16, #tpu.memory_space<vmem>>, vector<144x512xbf16>
    %cst_29 = arith.constant dense<0.000000e+00> : vector<16x512xf32>
    %65 = tpu.matmul %63, %64, %cst_29 {dimension_numbers = #tpu.dot_dimension_numbers<[1], [0], [0], [1], [0, 0, 1, 1], [], []>} : vector<16x144xbf16>, vector<144x512xbf16>, vector<16x512xf32> -> vector<16x512xf32>
    %66 = arith.truncf %65 : vector<16x512xf32> to vector<16x512xbf16>
    %c0_30 = arith.constant 0 : index
    %c0_31 = arith.constant 0 : index
    %67 = vector.load %arg6[%c0_30, %c0_31] : memref<16x512xbf16, #tpu.memory_space<vmem>>, vector<16x512xbf16>
    tpu.vector_store %arg6[%c0_30, %c0_31], %66 {strides = array<i32>} : memref<16x512xbf16, #tpu.memory_space<vmem>>, vector<16x512xbf16>,
    %cst_32 = arith.constant dense<0.000000e+00> : vector<16xf32>
    %68 = vector.multi_reduction <add>, %65, %cst_32 [1] : vector<16x512xf32> to vector<16xf32>
    %69 = vector.shape_cast %68 : vector<16xf32> to vector<16x1xf32>
    %c0_33 = arith.constant 0 : index
    %c0_34 = arith.constant 0 : index
    %c0_35 = arith.constant 0 : index
    %70 = vector.load %arg7[%c0_33, %c0_34, %c0_35] : memref<1x16x1xf32, #tpu.memory_space<vmem>>, vector<1x16x1xf32>
    %71 = vector.shape_cast %70 : vector<1x16x1xf32> to vector<16x1xf32>
    %72 = vector.shape_cast %69 : vector<16x1xf32> to vector<1x16x1xf32>
    tpu.vector_store %arg7[%c0_33, %c0_34, %c0_35], %72 {strides = array<i32>} : memref<1x16x1xf32, #tpu.memory_space<vmem>>, vector<1x16x1xf32>,
    %73 = arith.mulf %65, %65 : vector<16x512xf32>
    %cst_36 = arith.constant dense<0.000000e+00> : vector<16xf32>
    %74 = vector.multi_reduction <add>, %73, %cst_36 [1] : vector<16x512xf32> to vector<16xf32>
    %75 = vector.shape_cast %74 : vector<16xf32> to vector<16x1xf32>
    %c0_37 = arith.constant 0 : index
    %c0_38 = arith.constant 0 : index
    %c0_39 = arith.constant 0 : index
    %76 = vector.load %arg8[%c0_37, %c0_38, %c0_39] : memref<1x16x1xf32, #tpu.memory_space<vmem>>, vector<1x16x1xf32>
    %77 = vector.shape_cast %76 : vector<1x16x1xf32> to vector<16x1xf32>
    %78 = vector.shape_cast %75 : vector<16x1xf32> to vector<1x16x1xf32>
    tpu.vector_store %arg8[%c0_37, %c0_38, %c0_39], %78 {strides = array<i32>} : memref<1x16x1xf32, #tpu.memory_space<vmem>>, vector<1x16x1xf32>,
    return
  }
  func.func @transform_0(%arg0: i32) -> (i32, i32) {
    %c0_i32 = arith.constant 0 : i32
    %c0_i32_0 = arith.constant 0 : i32
    return %c0_i32, %arg0 : i32, i32
  }
  func.func @transform_1(%arg0: i32) -> (i32, i32) {
    %c0_i32 = arith.constant 0 : i32
    %c0_i32_0 = arith.constant 0 : i32
    %c0_i32_1 = arith.constant 0 : i32
    return %c0_i32, %c0_i32_0 : i32, i32
  }
  func.func @transform_2(%arg0: i32) -> (i32, i32) {
    %c0_i32 = arith.constant 0 : i32
    %c0_i32_0 = arith.constant 0 : i32
    %c0_i32_1 = arith.constant 0 : i32
    return %c0_i32, %c0_i32_0 : i32, i32
  }
  func.func @transform_3(%arg0: i32) -> (i32, i32) {
    %c0_i32 = arith.constant 0 : i32
    %c0_i32_0 = arith.constant 0 : i32
    %c0_i32_1 = arith.constant 0 : i32
    return %c0_i32, %c0_i32_0 : i32, i32
  }
  func.func @transform_4(%arg0: i32) -> (i32, i32) {
    %c0_i32 = arith.constant 0 : i32
    %c0_i32_0 = arith.constant 0 : i32
    %c0_i32_1 = arith.constant 0 : i32
    return %c0_i32, %c0_i32_0 : i32, i32
  }
  func.func @transform_5(%arg0: i32) -> (i32, i32) {
    %c0_i32 = arith.constant 0 : i32
    %c0_i32_0 = arith.constant 0 : i32
    return %c0_i32, %arg0 : i32, i32
  }
  func.func @transform_6(%arg0: i32) -> (i32, i32, i32) {
    %c0_i32 = arith.constant 0 : i32
    %c0_i32_0 = arith.constant 0 : i32
    %c0_i32_1 = arith.constant 0 : i32
    return %arg0, %c0_i32, %c0_i32_0 : i32, i32, i32
  }
  func.func @transform_7(%arg0: i32) -> (i32, i32, i32) {
    %c0_i32 = arith.constant 0 : i32
    %c0_i32_0 = arith.constant 0 : i32
    %c0_i32_1 = arith.constant 0 : i32
    return %arg0, %c0_i32, %c0_i32_0 : i32, i32, i32
  }
}

</mosaic_0001>

<llo_original>
// kernel: midscope_conv2d.5
$region0: #{midscope_conv2d.5}
  #allocation0 [shape = 'u32[]', space=smem, size = 0x4, offset = 0x4, fixed_abs, tag = 'smem constant byte address 0x4 - core index']
  #allocation1 [shape = 'u32[144,128]{1,0:T(1,128)}', space=vmem, size = 0x12000, scoped, tag = 'internal scratch']
  %s0 = inlined_call_operand.vmem [shape: bf16[16,512], index: 0, kind: input, shape index: {}, may-alias: {0,3}]
  %s1 = inlined_call_operand.vmem [shape: f32[16,1], index: 1, kind: input, shape index: {}]
  %s2 = inlined_call_operand.vmem [shape: f32[16,1], index: 2, kind: input, shape index: {}]
  %s3 = inlined_call_operand.vmem [shape: bf16[16,512], index: 3, kind: output, shape index: {}, may-alias: {0,3}]
  %s4 = sld [smem:[#allocation0]]
  $region22: #{midscope_conv2d.5} parent=0
    _
  %s6 = ssub.s32 1, %s4
  %s7 = scalar_select 0, %s6, %s4
  // Predicated region
  $region2: #{midscope_conv2d.5} parent=0 // pred_check
    _
  $region3: #{midscope_conv2d.5} parent=0 // pred_check_branch
    %9 = sbr.rel (0) target = $region5
  $region4: #{midscope_conv2d.5} parent=0 // pred_region
    _
  $region5: #{midscope_conv2d.5} parent=0 // pred_fallthru
    _
  // Predicated region
  $region6: #{midscope_conv2d.5} parent=0 // pred_check
    _
  $region7: #{midscope_conv2d.5} parent=0 // pred_check_branch
    %11 = sbr.rel (0) target = $region9
  $region8: #{midscope_conv2d.5} parent=0 // pred_region
    _
  $region9: #{midscope_conv2d.5} parent=0 // pred_fallthru
    _
  // Predicated region
  $region10: #{midscope_conv2d.5} parent=0 // pred_check
    _
  $region11: #{midscope_conv2d.5} parent=0 // pred_check_branch
    %13 = sbr.rel (0) target = $region13
  $region12: #{midscope_conv2d.5} parent=0 // pred_region
    _
  $region13: #{midscope_conv2d.5} parent=0 // pred_fallthru
    _
  %v14 = vld [vmem:[%s0] sm:$0xff]
  %v15 = vld [vmem:[%s0 + $0x8] sm:$0xff]
  %v16 = vld [vmem:[%s0 + $0x10] sm:$0xff]
  %v17 = vld [vmem:[%s0 + $0x18] sm:$0xff]
  %v18 = vunpack.c.l.bf16 %v14
  %v19 = vunpack.c.h.bf16 %v14
  %v20 = vunpack.c.l.bf16 %v15
  %v21 = vunpack.c.h.bf16 %v15
  %v22 = vunpack.c.l.bf16 %v16
  %v23 = vunpack.c.h.bf16 %v16
  %v24 = vunpack.c.l.bf16 %v17
  %v25 = vunpack.c.h.bf16 %v17
  %v26 = vld [vmem:[%s1] sm:$0xff]
  %v27 = vld [vmem:[%s1 + $0x8] sm:$0xff]
  %29 = vset.pattern.permute.xlu0 0
  %30 = vperm.xlu0 %29, %v26
  %v31 = vpop.permute.xlu0 %30
  %34 = vset.pattern.permute.xlu0 0
  %35 = vperm.xlu0 %34, %v27
  %v36 = vpop.permute.xlu0 %35
  %v38 = vmul.f32 %v18, %v31
  %v39 = vmul.f32 %v19, %v31
  %v40 = vmul.f32 %v20, %v31
  %v41 = vmul.f32 %v21, %v31
  %v42 = vmul.f32 %v22, %v36
  %v43 = vmul.f32 %v23, %v36
  %v44 = vmul.f32 %v24, %v36
  %v45 = vmul.f32 %v25, %v36
  %v46 = vld [vmem:[%s2] sm:$0xff]
  %v47 = vld [vmem:[%s2 + $0x8] sm:$0xff]
  %49 = vset.pattern.permute.xlu0 0
  %50 = vperm.xlu0 %49, %v46
  %v51 = vpop.permute.xlu0 %50
  %54 = vset.pattern.permute.xlu0 0
  %55 = vperm.xlu0 %54, %v47
  %v56 = vpop.permute.xlu0 %55
  %v58 = vadd.f32 %v38, %v51
  %v59 = vadd.f32 %v39, %v51
  %v60 = vadd.f32 %v40, %v51
  %v61 = vadd.f32 %v41, %v51
  %v62 = vadd.f32 %v42, %v56
  %v63 = vadd.f32 %v43, %v56
  %v64 = vadd.f32 %v44, %v56
  %v65 = vadd.f32 %v45, %v56
  %v66 = vmax.f32 %v58, 0.0
  %v67 = vmax.f32 %v59, 0.0
  %v68 = vmax.f32 %v60, 0.0
  %v69 = vmax.f32 %v61, 0.0
  %v70 = vmax.f32 %v62, 0.0
  %v71 = vmax.f32 %v63, 0.0
  %v72 = vmax.f32 %v64, 0.0
  %v73 = vmax.f32 %v65, 0.0
  %v74 = vpack.c.bf16 %v70, %v66
  %v75 = vpack.c.bf16 %v71, %v67
  %v76 = vpack.c.bf16 %v72, %v68
  %v77 = vpack.c.bf16 %v73, %v69
  %v82 = vunpack.c.l.b16 %v74
  %v83 = vunpack.c.l.b16 %v75
  %v84 = vunpack.c.l.b16 %v76
  %v85 = vunpack.c.l.b16 %v77
  %v86 = vunpack.c.h.b16 %v74
  %v87 = vunpack.c.h.b16 %v75
  %v88 = vunpack.c.h.b16 %v76
  %v89 = vunpack.c.h.b16 %v77
  %v90 = vpack.c.b16 %v83, %v82
  %v91 = vpack.c.b16 %v85, %v84
  %v92 = vpack.c.b16 %v87, %v86
  %v93 = vpack.c.b16 %v89, %v88
  %98 = vst [vmem:[%s3] sm:$0xff] %v90
  %99 = vst [vmem:[%s3 + $0x8] sm:$0xff] %v91
  %100 = vst [vmem:[%s3 + $0x10] sm:$0xff] %v92
  %101 = vst [vmem:[%s3 + $0x18] sm:$0xff] %v93
  // Predicated region
  $region14: #{midscope_conv2d.5} parent=0 // pred_check
    _
  $region15: #{midscope_conv2d.5} parent=0 // pred_check_branch
    %103 = sbr.rel (0) target = $region17
  $region16: #{midscope_conv2d.5} parent=0 // pred_region
    _
  $region17: #{midscope_conv2d.5} parent=0 // pred_fallthru
    _
  // Predicated region
  $region18: #{midscope_conv2d.5} parent=0 // pred_check
    _
  $region19: #{midscope_conv2d.5} parent=0 // pred_check_branch
    %105 = sbr.rel (0) target = $region21
  $region20: #{midscope_conv2d.5} parent=0 // pred_region
    _
  $region21: #{midscope_conv2d.5} parent=0 // pred_fallthru
    _

// kernel: midscope_conv2d.3
$region0: #{midscope_conv2d.3}
  #allocation0 [shape = 'u32[]', space=smem, size = 0x4, offset = 0x4, fixed_abs, tag = 'smem constant byte address 0x4 - core index']
  #allocation1 [shape = 'u32[144,128]{1,0:T(1,128)}', space=vmem, size = 0x12000, scoped, tag = 'internal scratch']
  #allocation2 [shape = 'bf16[144,512]{1,0:T(16,128)(2,1)}', space=vmem, size = 0x24000, scoped, tag = 'scratch operand']
  %s0 = inlined_call_operand.vmem [shape: f32[16,512], index: 0, kind: input, shape index: {}]
  %s1 = inlined_call_operand.vmem [shape: bf16[16,144], index: 1, kind: input, shape index: {}]
  %s2 = inlined_call_operand.vmem [shape: f32[9,512], index: 2, kind: input, shape index: {}]
  %s3 = inlined_call_operand.vmem [shape: bf16[16,512], index: 3, kind: output, shape index: {0}]
  %s4 = inlined_call_operand.vmem [shape: f32[1,16,1], index: 4, kind: output, shape index: {1}]
  %s5 = inlined_call_operand.vmem [shape: f32[1,16,1], index: 5, kind: output, shape index: {2}]
  %6 = xla_tuple %s3, %s4, %s5
  %s7 = sld [smem:[#allocation0]]
  $region38: #{midscope_conv2d.3} parent=0
    _
  %s9 = ssub.s32 1, %s7
  %s10 = scalar_select 0, %s9, %s7
  // Predicated region
  $region2: #{midscope_conv2d.3} parent=0 // pred_check
    _
  $region3: #{midscope_conv2d.3} parent=0 // pred_check_branch
    %12 = sbr.rel (0) target = $region5
  $region4: #{midscope_conv2d.3} parent=0 // pred_region
    _
  $region5: #{midscope_conv2d.3} parent=0 // pred_fallthru
    _
  // Predicated region
  $region6: #{midscope_conv2d.3} parent=0 // pred_check
    _
  $region7: #{midscope_conv2d.3} parent=0 // pred_check_branch
    %14 = sbr.rel (0) target = $region9
  $region8: #{midscope_conv2d.3} parent=0 // pred_region
    _
  $region9: #{midscope_conv2d.3} parent=0 // pred_fallthru
    _
  // Predicated region
  $region10: #{midscope_conv2d.3} parent=0 // pred_check
    _
  $region11: #{midscope_conv2d.3} parent=0 // pred_check_branch
    %16 = sbr.rel (0) target = $region13
  $region12: #{midscope_conv2d.3} parent=0 // pred_region
    _
  $region13: #{midscope_conv2d.3} parent=0 // pred_fallthru
    _
  %v18 = vld [vmem:[%s0] sm:$0xff]
  %v19 = vld [vmem:[%s0 + $0x8] sm:$0xff]
  %v20 = vld [vmem:[%s0 + $0x10] sm:$0xff]
  %v21 = vld [vmem:[%s0 + $0x18] sm:$0xff]
  %v22 = vld [vmem:[%s0 + $0x20] sm:$0xff]
  %v23 = vld [vmem:[%s0 + $0x28] sm:$0xff]
  %v24 = vld [vmem:[%s0 + $0x30] sm:$0xff]
  %v25 = vld [vmem:[%s0 + $0x38] sm:$0xff]
  %26 = vrot.lane.b32.xlu0 %v18, 17
  %v27 = vpop.permute.xlu0 %26
  %28 = vrot.lane.b32.xlu0 %v22, 17
  %v29 = vpop.permute.xlu0 %28
  %30 = vrot.lane.b32.xlu0 %v19, 17
  %v31 = vpop.permute.xlu0 %30
  %32 = vrot.lane.b32.xlu0 %v23, 17
  %v33 = vpop.permute.xlu0 %32
  %34 = vrot.lane.b32.xlu0 %v20, 17
  %v35 = vpop.permute.xlu0 %34
  %36 = vrot.lane.b32.xlu0 %v24, 17
  %v37 = vpop.permute.xlu0 %36
  %38 = vrot.lane.b32.xlu0 %v21, 17
  %v39 = vpop.permute.xlu0 %38
  %40 = vrot.lane.b32.xlu0 %v25, 17
  %v41 = vpop.permute.xlu0 %40
  %v42 = vlaneseq
  %v43 = vand.u32 %v42, 127
  %vm44 = vcmp.lt.s32.totalorder %v43, 17
  %v45 = vsel %vm44, %v35, %v39
  %v46 = vsel %vm44, %v37, %v41
  %v47 = vsel %vm44, %v31, %v35
  %v48 = vsel %vm44, %v33, %v37
  %v49 = vsel %vm44, %v27, %v31
  %v50 = vsel %vm44, %v29, %v33
  %v51 = vsel %vm44, %v39, %v27
  %v52 = vsel %vm44, %v41, %v29
  %v53 = vld [vmem:[%s2] ss:$8 sm:$0xf]
  %v55 = vlaneseq
  %v56 = vshrl.u32 %v55, 7
  %v57 = vsub.s32 0, %v56
  %v58 = vrot.slane %v53, %v57
  %v59 = vlaneseq
  %v60 = vshrl.u32 %v59, 7
  %v61 = vsub.s32 1, %v60
  %v62 = vrot.slane %v53, %v61
  %v63 = vlaneseq
  %v64 = vshrl.u32 %v63, 7
  %v65 = vsub.s32 2, %v64
  %v66 = vrot.slane %v53, %v65
  %v67 = vlaneseq
  %v68 = vshrl.u32 %v67, 7
  %v69 = vsub.s32 3, %v68
  %v70 = vrot.slane %v53, %v69
  %v75 = vmul.f32 %v51, %v58
  %v76 = vmul.f32 %v49, %v62
  %v77 = vmul.f32 %v47, %v66
  %v78 = vmul.f32 %v45, %v70
  %v79 = vmul.f32 %v52, %v58
  %v80 = vmul.f32 %v50, %v62
  %v81 = vmul.f32 %v48, %v66
  %v82 = vmul.f32 %v46, %v70
  %v83 = vpack.c.bf16 %v79, %v75
  %v84 = vpack.c.bf16 %v80, %v76
  %v85 = vpack.c.bf16 %v81, %v77
  %v86 = vpack.c.bf16 %v82, %v78
  %87 = vst [vmem:[#allocation2] sm:$0xff] %v83
  %88 = vst [vmem:[#allocation2 + $0x8] sm:$0xff] %v84
  %89 = vst [vmem:[#allocation2 + $0x10] sm:$0xff] %v85
  %90 = vst [vmem:[#allocation2 + $0x18] sm:$0xff] %v86
  %91 = vrot.lane.b32.xlu0 %v18, 16
  %v92 = vpop.permute.xlu0 %91
  %93 = vrot.lane.b32.xlu0 %v22, 16
  %v94 = vpop.permute.xlu0 %93
  %95 = vrot.lane.b32.xlu0 %v19, 16
  %v96 = vpop.permute.xlu0 %95
  %97 = vrot.lane.b32.xlu0 %v23, 16
  %v98 = vpop.permute.xlu0 %97
  %99 = vrot.lane.b32.xlu0 %v20, 16
  %v100 = vpop.permute.xlu0 %99
  %101 = vrot.lane.b32.xlu0 %v24, 16
  %v102 = vpop.permute.xlu0 %101
  %103 = vrot.lane.b32.xlu0 %v21, 16
  %v104 = vpop.permute.xlu0 %103
  %105 = vrot.lane.b32.xlu0 %v25, 16
  %v106 = vpop.permute.xlu0 %105
  %vm107 = vcmp.lt.s32.totalorder %v43, 16
  %v108 = vsel %vm107, %v100, %v104
  %v109 = vsel %vm107, %v102, %v106
  %v110 = vsel %vm107, %v96, %v100
  %v111 = vsel %vm107, %v98, %v102
  %v112 = vsel %vm107, %v92, %v96
  %v113 = vsel %vm107, %v94, %v98
  %v114 = vsel %vm107, %v104, %v92
  %v115 = vsel %vm107, %v106, %v94
  %s116 = scalar_lea.vmem %s2, 1
  %v117 = vld [vmem:[%s116] ss:$8 sm:$0xf]
  %v119 = vlaneseq
  %v120 = vshrl.u32 %v119, 7
  %v121 = vsub.s32 0, %v120
  %v122 = vrot.slane %v117, %v121
  %v123 = vlaneseq
  %v124 = vshrl.u32 %v123, 7
  %v125 = vsub.s32 1, %v124
  %v126 = vrot.slane %v117, %v125
  %v127 = vlaneseq
  %v128 = vshrl.u32 %v127, 7
  %v129 = vsub.s32 2, %v128
  %v130 = vrot.slane %v117, %v129
  %v131 = vlaneseq
  %v132 = vshrl.u32 %v131, 7
  %v133 = vsub.s32 3, %v132
  %v134 = vrot.slane %v117, %v133
  %v139 = vmul.f32 %v114, %v122
  %v140 = vmul.f32 %v112, %v126
  %v141 = vmul.f32 %v110, %v130
  %v142 = vmul.f32 %v108, %v134
  %v143 = vmul.f32 %v115, %v122
  %v144 = vmul.f32 %v113, %v126
  %v145 = vmul.f32 %v111, %v130
  %v146 = vmul.f32 %v109, %v134
  %v147 = vpack.c.bf16 %v143, %v139
  %v148 = vpack.c.bf16 %v144, %v140
  %v149 = vpack.c.bf16 %v145, %v141
  %v150 = vpack.c.bf16 %v146, %v142
  %151 = vst [vmem:[#allocation2 + $0x20] sm:$0xff] %v147
  %152 = vst [vmem:[#allocation2 + $0x28] sm:$0xff] %v148
  %153 = vst [vmem:[#allocation2 + $0x30] sm:$0xff] %v149
  %154 = vst [vmem:[#allocation2 + $0x38] sm:$0xff] %v150
  %155 = vrot.lane.b32.xlu0 %v18, 15
  %v156 = vpop.permute.xlu0 %155
  %157 = vrot.lane.b32.xlu0 %v22, 15
  %v158 = vpop.permute.xlu0 %157
  %159 = vrot.lane.b32.xlu0 %v19, 15
  %v160 = vpop.permute.xlu0 %159
  %161 = vrot.lane.b32.xlu0 %v23, 15
  %v162 = vpop.permute.xlu0 %161
  %163 = vrot.lane.b32.xlu0 %v20, 15
  %v164 = vpop.permute.xlu0 %163
  %165 = vrot.lane.b32.xlu0 %v24, 15
  %v166 = vpop.permute.xlu0 %165
  %167 = vrot.lane.b32.xlu0 %v21, 15
  %v168 = vpop.permute.xlu0 %167
  %169 = vrot.lane.b32.xlu0 %v25, 15
  %v170 = vpop.permute.xlu0 %169
  %vm171 = vcmp.lt.s32.totalorder %v43, 15
  %v172 = vsel %vm171, %v164, %v168
  %v173 = vsel %vm171, %v166, %v170
  %v174 = vsel %vm171, %v160, %v164
  %v175 = vsel %vm171, %v162, %v166
  %v176 = vsel %vm171, %v156, %v160
  %v177 = vsel %vm171, %v158, %v162
  %v178 = vsel %vm171, %v168, %v156
  %v179 = vsel %vm171, %v170, %v158
  %s180 = scalar_lea.vmem %s2, 2
  %v181 = vld [vmem:[%s180] ss:$8 sm:$0xf]
  %v183 = vlaneseq
  %v184 = vshrl.u32 %v183, 7
  %v185 = vsub.s32 0, %v184
  %v186 = vrot.slane %v181, %v185
  %v187 = vlaneseq
  %v188 = vshrl.u32 %v187, 7
  %v189 = vsub.s32 1, %v188
  %v190 = vrot.slane %v181, %v189
  %v191 = vlaneseq
  %v192 = vshrl.u32 %v191, 7
  %v193 = vsub.s32 2, %v192
  %v194 = vrot.slane %v181, %v193
  %v195 = vlaneseq
  %v196 = vshrl.u32 %v195, 7
  %v197 = vsub.s32 3, %v196
  %v198 = vrot.slane %v181, %v197
  %v203 = vmul.f32 %v178, %v186
  %v204 = vmul.f32 %v176, %v190
  %v205 = vmul.f32 %v174, %v194
  %v206 = vmul.f32 %v172, %v198
  %v207 = vmul.f32 %v179, %v186
  %v208 = vmul.f32 %v177, %v190
  %v209 = vmul.f32 %v175, %v194
  %v210 = vmul.f32 %v173, %v198
  %v211 = vpack.c.bf16 %v207, %v203
  %v212 = vpack.c.bf16 %v208, %v204
  %v213 = vpack.c.bf16 %v209, %v205
  %v214 = vpack.c.bf16 %v210, %v206
  %215 = vst [vmem:[#allocation2 + $0x40] sm:$0xff] %v211
  %216 = vst [vmem:[#allocation2 + $0x48] sm:$0xff] %v212
  %217 = vst [vmem:[#allocation2 + $0x50] sm:$0xff] %v213
  %218 = vst [vmem:[#allocation2 + $0x58] sm:$0xff] %v214
  %219 = vrot.lane.b32.xlu0 %v18, 1
  %v220 = vpop.permute.xlu0 %219
  %221 = vrot.lane.b32.xlu0 %v22, 1
  %v222 = vpop.permute.xlu0 %221
  %223 = vrot.lane.b32.xlu0 %v19, 1
  %v224 = vpop.permute.xlu0 %223
  %225 = vrot.lane.b32.xlu0 %v23, 1
  %v226 = vpop.permute.xlu0 %225
  %227 = vrot.lane.b32.xlu0 %v20, 1
  %v228 = vpop.permute.xlu0 %227
  %229 = vrot.lane.b32.xlu0 %v24, 1
  %v230 = vpop.permute.xlu0 %229
  %231 = vrot.lane.b32.xlu0 %v21, 1
  %v232 = vpop.permute.xlu0 %231
  %233 = vrot.lane.b32.xlu0 %v25, 1
  %v234 = vpop.permute.xlu0 %233
  %vm235 = vcmp.lt.s32.totalorder %v43, 1
  %v236 = vsel %vm235, %v228, %v232
  %v237 = vsel %vm235, %v230, %v234
  %v238 = vsel %vm235, %v224, %v228
  %v239 = vsel %vm235, %v226, %v230
  %v240 = vsel %vm235, %v220, %v224
  %v241 = vsel %vm235, %v222, %v226
  %v242 = vsel %vm235, %v232, %v220
  %v243 = vsel %vm235, %v234, %v222
  %s244 = scalar_lea.vmem %s2, 3
  %v245 = vld [vmem:[%s244] ss:$8 sm:$0xf]
  %v247 = vlaneseq
  %v248 = vshrl.u32 %v247, 7
  %v249 = vsub.s32 0, %v248
  %v250 = vrot.slane %v245, %v249
  %v251 = vlaneseq
  %v252 = vshrl.u32 %v251, 7
  %v253 = vsub.s32 1, %v252
  %v254 = vrot.slane %v245, %v253
  %v255 = vlaneseq
  %v256 = vshrl.u32 %v255, 7
  %v257 = vsub.s32 2, %v256
  %v258 = vrot.slane %v245, %v257
  %v259 = vlaneseq
  %v260 = vshrl.u32 %v259, 7
  %v261 = vsub.s32 3, %v260
  %v262 = vrot.slane %v245, %v261
  %v267 = vmul.f32 %v242, %v250
  %v268 = vmul.f32 %v240, %v254
  %v269 = vmul.f32 %v238, %v258
  %v270 = vmul.f32 %v236, %v262
  %v271 = vmul.f32 %v243, %v250
  %v272 = vmul.f32 %v241, %v254
  %v273 = vmul.f32 %v239, %v258
  %v274 = vmul.f32 %v237, %v262
  %v275 = vpack.c.bf16 %v271, %v267
  %v276 = vpack.c.bf16 %v272, %v268
  %v277 = vpack.c.bf16 %v273, %v269
  %v278 = vpack.c.bf16 %v274, %v270
  %279 = vst [vmem:[#allocation2 + $0x60] sm:$0xff] %v275
  %280 = vst [vmem:[#allocation2 + $0x68] sm:$0xff] %v276
  %281 = vst [vmem:[#allocation2 + $0x70] sm:$0xff] %v277
  %282 = vst [vmem:[#allocation2 + $0x78] sm:$0xff] %v278
  %s283 = scalar_lea.vmem %s2, 4
  %v284 = vld [vmem:[%s283] ss:$8 sm:$0xf]
  %v286 = vlaneseq
  %v287 = vshrl.u32 %v286, 7
  %v288 = vsub.s32 0, %v287
  %v289 = vrot.slane %v284, %v288
  %v290 = vlaneseq
  %v291 = vshrl.u32 %v290, 7
  %v292 = vsub.s32 1, %v291
  %v293 = vrot.slane %v284, %v292
  %v294 = vlaneseq
  %v295 = vshrl.u32 %v294, 7
  %v296 = vsub.s32 2, %v295
  %v297 = vrot.slane %v284, %v296
  %v298 = vlaneseq
  %v299 = vshrl.u32 %v298, 7
  %v300 = vsub.s32 3, %v299
  %v301 = vrot.slane %v284, %v300
  %v306 = vmul.f32 %v18, %v289
  %v307 = vmul.f32 %v19, %v293
  %v308 = vmul.f32 %v20, %v297
  %v309 = vmul.f32 %v21, %v301
  %v310 = vmul.f32 %v22, %v289
  %v311 = vmul.f32 %v23, %v293
  %v312 = vmul.f32 %v24, %v297
  %v313 = vmul.f32 %v25, %v301
  %v314 = vpack.c.bf16 %v310, %v306
  %v315 = vpack.c.bf16 %v311, %v307
  %v316 = vpack.c.bf16 %v312, %v308
  %v317 = vpack.c.bf16 %v313, %v309
  %318 = vst [vmem:[#allocation2 + $0x80] sm:$0xff] %v314
  %319 = vst [vmem:[#allocation2 + $0x88] sm:$0xff] %v315
  %320 = vst [vmem:[#allocation2 + $0x90] sm:$0xff] %v316
  %321 = vst [vmem:[#allocation2 + $0x98] sm:$0xff] %v317
  %322 = vrot.lane.b32.xlu0 %v18, 127
  %v323 = vpop.permute.xlu0 %322
  %324 = vrot.lane.b32.xlu0 %v22, 127
  %v325 = vpop.permute.xlu0 %324
  %326 = vrot.lane.b32.xlu0 %v19, 127
  %v327 = vpop.permute.xlu0 %326
  %328 = vrot.lane.b32.xlu0 %v23, 127
  %v329 = vpop.permute.xlu0 %328
  %330 = vrot.lane.b32.xlu0 %v20, 127
  %v331 = vpop.permute.xlu0 %330
  %332 = vrot.lane.b32.xlu0 %v24, 127
  %v333 = vpop.permute.xlu0 %332
  %334 = vrot.lane.b32.xlu0 %v21, 127
  %v335 = vpop.permute.xlu0 %334
  %336 = vrot.lane.b32.xlu0 %v25, 127
  %v337 = vpop.permute.xlu0 %336
  %vm338 = vcmp.lt.s32.totalorder %v43, 127
  %v339 = vsel %vm338, %v331, %v335
  %v340 = vsel %vm338, %v333, %v337
  %v341 = vsel %vm338, %v327, %v331
  %v342 = vsel %vm338, %v329, %v333
  %v343 = vsel %vm338, %v323, %v327
  %v344 = vsel %vm338, %v325, %v329
  %v345 = vsel %vm338, %v335, %v323
  %v346 = vsel %vm338, %v337, %v325
  %s347 = scalar_lea.vmem %s2, 5
  %v348 = vld [vmem:[%s347] ss:$8 sm:$0xf]
  %v350 = vlaneseq
  %v351 = vshrl.u32 %v350, 7
  %v352 = vsub.s32 0, %v351
  %v353 = vrot.slane %v348, %v352
  %v354 = vlaneseq
  %v355 = vshrl.u32 %v354, 7
  %v356 = vsub.s32 1, %v355
  %v357 = vrot.slane %v348, %v356
  %v358 = vlaneseq
  %v359 = vshrl.u32 %v358, 7
  %v360 = vsub.s32 2, %v359
  %v361 = vrot.slane %v348, %v360
  %v362 = vlaneseq
  %v363 = vshrl.u32 %v362, 7
  %v364 = vsub.s32 3, %v363
  %v365 = vrot.slane %v348, %v364
  %v370 = vmul.f32 %v343, %v353
  %v371 = vmul.f32 %v341, %v357
  %v372 = vmul.f32 %v339, %v361
  %v373 = vmul.f32 %v345, %v365
  %v374 = vmul.f32 %v344, %v353
  %v375 = vmul.f32 %v342, %v357
  %v376 = vmul.f32 %v340, %v361
  %v377 = vmul.f32 %v346, %v365
  %v378 = vpack.c.bf16 %v374, %v370
  %v379 = vpack.c.bf16 %v375, %v371
  %v380 = vpack.c.bf16 %v376, %v372
  %v381 = vpack.c.bf16 %v377, %v373
  %382 = vst [vmem:[#allocation2 + $0xa0] sm:$0xff] %v378
  %383 = vst [vmem:[#allocation2 + $0xa8] sm:$0xff] %v379
  %384 = vst [vmem:[#allocation2 + $0xb0] sm:$0xff] %v380
  %385 = vst [vmem:[#allocation2 + $0xb8] sm:$0xff] %v381
  %386 = vrot.lane.b32.xlu0 %v18, 113
  %v387 = vpop.permute.xlu0 %386
  %388 = vrot.lane.b32.xlu0 %v22, 113
  %v389 = vpop.permute.xlu0 %388
  %390 = vrot.lane.b32.xlu0 %v19, 113
  %v391 = vpop.permute.xlu0 %390
  %392 = vrot.lane.b32.xlu0 %v23, 113
  %v393 = vpop.permute.xlu0 %392
  %394 = vrot.lane.b32.xlu0 %v20, 113
  %v395 = vpop.permute.xlu0 %394
  %396 = vrot.lane.b32.xlu0 %v24, 113
  %v397 = vpop.permute.xlu0 %396
  %398 = vrot.lane.b32.xlu0 %v21, 113
  %v399 = vpop.permute.xlu0 %398
  %400 = vrot.lane.b32.xlu0 %v25, 113
  %v401 = vpop.permute.xlu0 %400
  %vm402 = vcmp.lt.s32.totalorder %v43, 113
  %v403 = vsel %vm402, %v395, %v399
  %v404 = vsel %vm402, %v397, %v401
  %v405 = vsel %vm402, %v391, %v395
  %v406 = vsel %vm402, %v393, %v397
  %v407 = vsel %vm402, %v387, %v391
  %v408 = vsel %vm402, %v389, %v393
  %v409 = vsel %vm402, %v399, %v387
  %v410 = vsel %vm402, %v401, %v389
  %s411 = scalar_lea.vmem %s2, 6
  %v412 = vld [vmem:[%s411] ss:$8 sm:$0xf]
  %v414 = vlaneseq
  %v415 = vshrl.u32 %v414, 7
  %v416 = vsub.s32 0, %v415
  %v417 = vrot.slane %v412, %v416
  %v418 = vlaneseq
  %v419 = vshrl.u32 %v418, 7
  %v420 = vsub.s32 1, %v419
  %v421 = vrot.slane %v412, %v420
  %v422 = vlaneseq
  %v423 = vshrl.u32 %v422, 7
  %v424 = vsub.s32 2, %v423
  %v425 = vrot.slane %v412, %v424
  %v426 = vlaneseq
  %v427 = vshrl.u32 %v426, 7
  %v428 = vsub.s32 3, %v427
  %v429 = vrot.slane %v412, %v428
  %v434 = vmul.f32 %v407, %v417
  %v435 = vmul.f32 %v405, %v421
  %v436 = vmul.f32 %v403, %v425
  %v437 = vmul.f32 %v409, %v429
  %v438 = vmul.f32 %v408, %v417
  %v439 = vmul.f32 %v406, %v421
  %v440 = vmul.f32 %v404, %v425
  %v441 = vmul.f32 %v410, %v429
  %v442 = vpack.c.bf16 %v438, %v434
  %v443 = vpack.c.bf16 %v439, %v435
  %v444 = vpack.c.bf16 %v440, %v436
  %v445 = vpack.c.bf16 %v441, %v437
  %446 = vst [vmem:[#allocation2 + $0xc0] sm:$0xff] %v442
  %447 = vst [vmem:[#allocation2 + $0xc8] sm:$0xff] %v443
  %448 = vst [vmem:[#allocation2 + $0xd0] sm:$0xff] %v444
  %449 = vst [vmem:[#allocation2 + $0xd8] sm:$0xff] %v445
  %450 = vrot.lane.b32.xlu0 %v18, 112
  %v451 = vpop.permute.xlu0 %450
  %452 = vrot.lane.b32.xlu0 %v22, 112
  %v453 = vpop.permute.xlu0 %452
  %454 = vrot.lane.b32.xlu0 %v19, 112
  %v455 = vpop.permute.xlu0 %454
  %456 = vrot.lane.b32.xlu0 %v23, 112
  %v457 = vpop.permute.xlu0 %456
  %458 = vrot.lane.b32.xlu0 %v20, 112
  %v459 = vpop.permute.xlu0 %458
  %460 = vrot.lane.b32.xlu0 %v24, 112
  %v461 = vpop.permute.xlu0 %460
  %462 = vrot.lane.b32.xlu0 %v21, 112
  %v463 = vpop.permute.xlu0 %462
  %464 = vrot.lane.b32.xlu0 %v25, 112
  %v465 = vpop.permute.xlu0 %464
  %vm466 = vcmp.lt.s32.totalorder %v43, 112
  %v467 = vsel %vm466, %v459, %v463
  %v468 = vsel %vm466, %v461, %v465
  %v469 = vsel %vm466, %v455, %v459
  %v470 = vsel %vm466, %v457, %v461
  %v471 = vsel %vm466, %v451, %v455
  %v472 = vsel %vm466, %v453, %v457
  %v473 = vsel %vm466, %v463, %v451
  %v474 = vsel %vm466, %v465, %v453
  %s475 = scalar_lea.vmem %s2, 7
  %v476 = vld [vmem:[%s475] ss:$8 sm:$0xf]
  %v478 = vlaneseq
  %v479 = vshrl.u32 %v478, 7
  %v480 = vsub.s32 0, %v479
  %v481 = vrot.slane %v476, %v480
  %v482 = vlaneseq
  %v483 = vshrl.u32 %v482, 7
  %v484 = vsub.s32 1, %v483
  %v485 = vrot.slane %v476, %v484
  %v486 = vlaneseq
  %v487 = vshrl.u32 %v486, 7
  %v488 = vsub.s32 2, %v487
  %v489 = vrot.slane %v476, %v488
  %v490 = vlaneseq
  %v491 = vshrl.u32 %v490, 7
  %v492 = vsub.s32 3, %v491
  %v493 = vrot.slane %v476, %v492
  %v498 = vmul.f32 %v471, %v481
  %v499 = vmul.f32 %v469, %v485
  %v500 = vmul.f32 %v467, %v489
  %v501 = vmul.f32 %v473, %v493
  %v502 = vmul.f32 %v472, %v481
  %v503 = vmul.f32 %v470, %v485
  %v504 = vmul.f32 %v468, %v489
  %v505 = vmul.f32 %v474, %v493
  %v506 = vpack.c.bf16 %v502, %v498
  %v507 = vpack.c.bf16 %v503, %v499
  %v508 = vpack.c.bf16 %v504, %v500
  %v509 = vpack.c.bf16 %v505, %v501
  %510 = vst [vmem:[#allocation2 + $0xe0] sm:$0xff] %v506
  %511 = vst [vmem:[#allocation2 + $0xe8] sm:$0xff] %v507
  %512 = vst [vmem:[#allocation2 + $0xf0] sm:$0xff] %v508
  %513 = vst [vmem:[#allocation2 + $0xf8] sm:$0xff] %v509
  %514 = vrot.lane.b32.xlu0 %v18, 111
  %v515 = vpop.permute.xlu0 %514
  %516 = vrot.lane.b32.xlu0 %v22, 111
  %v517 = vpop.permute.xlu0 %516
  %518 = vrot.lane.b32.xlu0 %v19, 111
  %v519 = vpop.permute.xlu0 %518
  %520 = vrot.lane.b32.xlu0 %v23, 111
  %v521 = vpop.permute.xlu0 %520
  %522 = vrot.lane.b32.xlu0 %v20, 111
  %v523 = vpop.permute.xlu0 %522
  %524 = vrot.lane.b32.xlu0 %v24, 111
  %v525 = vpop.permute.xlu0 %524
  %526 = vrot.lane.b32.xlu0 %v21, 111
  %v527 = vpop.permute.xlu0 %526
  %528 = vrot.lane.b32.xlu0 %v25, 111
  %v529 = vpop.permute.xlu0 %528
  %vm530 = vcmp.lt.s32.totalorder %v43, 111
  %v531 = vsel %vm530, %v523, %v527
  %v532 = vsel %vm530, %v525, %v529
  %v533 = vsel %vm530, %v519, %v523
  %v534 = vsel %vm530, %v521, %v525
  %v535 = vsel %vm530, %v515, %v519
  %v536 = vsel %vm530, %v517, %v521
  %v537 = vsel %vm530, %v527, %v515
  %v538 = vsel %vm530, %v529, %v517
  %s539 = scalar_lea.vmem %s2, 32
  %v540 = vld [vmem:[%s539] ss:$8 sm:$0xf]
  %v542 = vlaneseq
  %v543 = vshrl.u32 %v542, 7
  %v544 = vsub.s32 0, %v543
  %v545 = vrot.slane %v540, %v544
  %v546 = vlaneseq
  %v547 = vshrl.u32 %v546, 7
  %v548 = vsub.s32 1, %v547
  %v549 = vrot.slane %v540, %v548
  %v550 = vlaneseq
  %v551 = vshrl.u32 %v550, 7
  %v552 = vsub.s32 2, %v551
  %v553 = vrot.slane %v540, %v552
  %v554 = vlaneseq
  %v555 = vshrl.u32 %v554, 7
  %v556 = vsub.s32 3, %v555
  %v557 = vrot.slane %v540, %v556
  %v562 = vmul.f32 %v535, %v545
  %v563 = vmul.f32 %v533, %v549
  %v564 = vmul.f32 %v531, %v553
  %v565 = vmul.f32 %v537, %v557
  %v566 = vmul.f32 %v536, %v545
  %v567 = vmul.f32 %v534, %v549
  %v568 = vmul.f32 %v532, %v553
  %v569 = vmul.f32 %v538, %v557
  %v570 = vpack.c.bf16 %v566, %v562
  %v571 = vpack.c.bf16 %v567, %v563
  %v572 = vpack.c.bf16 %v568, %v564
  %v573 = vpack.c.bf16 %v569, %v565
  %574 = vst [vmem:[#allocation2 + $0x100] sm:$0xff] %v570
  %575 = vst [vmem:[#allocation2 + $0x108] sm:$0xff] %v571
  %576 = vst [vmem:[#allocation2 + $0x110] sm:$0xff] %v572
  %577 = vst [vmem:[#allocation2 + $0x118] sm:$0xff] %v573
  %v578 = vld [vmem:[%s1] sm:$0xff]
  %v579 = vld [vmem:[%s1 + $0x8] sm:$0xff]
  %v580 = vld [vmem:[#allocation2] sm:$0xff]
  %v581 = vld [vmem:[#allocation2 + $0x8] sm:$0xff]
  %v582 = vld [vmem:[#allocation2 + $0x10] sm:$0xff]
  %v583 = vld [vmem:[#allocation2 + $0x18] sm:$0xff]
  %v584 = vld [vmem:[#allocation2 + $0x20] sm:$0xff]
  %v585 = vld [vmem:[#allocation2 + $0x28] sm:$0xff]
  %v586 = vld [vmem:[#allocation2 + $0x30] sm:$0xff]
  %v587 = vld [vmem:[#allocation2 + $0x38] sm:$0xff]
  %v588 = vld [vmem:[#allocation2 + $0x40] sm:$0xff]
  %v589 = vld [vmem:[#allocation2 + $0x48] sm:$0xff]
  %v590 = vld [vmem:[#allocation2 + $0x50] sm:$0xff]
  %v591 = vld [vmem:[#allocation2 + $0x58] sm:$0xff]
  %v592 = vld [vmem:[#allocation2 + $0x60] sm:$0xff]
  %v593 = vld [vmem:[#allocation2 + $0x68] sm:$0xff]
  %v594 = vld [vmem:[#allocation2 + $0x70] sm:$0xff]
  %v595 = vld [vmem:[#allocation2 + $0x78] sm:$0xff]
  %v596 = vld [vmem:[#allocation2 + $0x80] sm:$0xff]
  %v597 = vld [vmem:[#allocation2 + $0x88] sm:$0xff]
  %v598 = vld [vmem:[#allocation2 + $0x90] sm:$0xff]
  %v599 = vld [vmem:[#allocation2 + $0x98] sm:$0xff]
  %v600 = vld [vmem:[#allocation2 + $0xa0] sm:$0xff]
  %v601 = vld [vmem:[#allocation2 + $0xa8] sm:$0xff]
  %v602 = vld [vmem:[#allocation2 + $0xb0] sm:$0xff]
  %v603 = vld [vmem:[#allocation2 + $0xb8] sm:$0xff]
  %v604 = vld [vmem:[#allocation2 + $0xc0] sm:$0xff]
  %v605 = vld [vmem:[#allocation2 + $0xc8] sm:$0xff]
  %v606 = vld [vmem:[#allocation2 + $0xd0] sm:$0xff]
  %v607 = vld [vmem:[#allocation2 + $0xd8] sm:$0xff]
  %v608 = vld [vmem:[#allocation2 + $0xe0] sm:$0xff]
  %v609 = vld [vmem:[#allocation2 + $0xe8] sm:$0xff]
  %v610 = vld [vmem:[#allocation2 + $0xf0] sm:$0xff]
  %v611 = vld [vmem:[#allocation2 + $0xf8] sm:$0xff]
  %v612 = vld [vmem:[#allocation2 + $0x100] sm:$0xff]
  %v613 = vld [vmem:[#allocation2 + $0x108] sm:$0xff]
  %v614 = vld [vmem:[#allocation2 + $0x110] sm:$0xff]
  %v615 = vld [vmem:[#allocation2 + $0x118] sm:$0xff]
  %v618 = vunpack.c.l.b16 %v578
  %v619 = vunpack.c.h.b16 %v578
  %v620 = vunpack.c.l.b16 %v579
  %v621 = vunpack.c.h.b16 %v579
  %v622 = vpack.c.b16 %v620, %v618
  %v623 = vpack.c.b16 %v621, %v619
  %vm625 = vcmask 130048
  %v627 = vsel %vm625, %v623, 0
  %629 = vmatprep.subr.bf16.mxu0 %v581
  %630 = vmatpush1.bf16.msra.mxu0 %v580
  %631 = vmatprep.subr.bf16.mxu0 %v585
  %632 = vmatpush1.bf16.msra.mxu0 %v584
  %633 = vmatprep.subr.bf16.mxu0 %v589
  %634 = vmatpush1.bf16.msra.mxu0 %v588
  %635 = vmatprep.subr.bf16.mxu0 %v593
  %636 = vmatpush1.bf16.msra.mxu0 %v592
  %637 = vmatprep.subr.bf16.mxu0 %v597
  %638 = vmatpush1.bf16.msra.mxu0 %v596
  %639 = vmatprep.subr.bf16.mxu0 %v601
  %640 = vmatpush1.bf16.msra.mxu0 %v600
  %641 = vmatprep.subr.bf16.mxu0 %v605
  %642 = vmatpush1.bf16.msra.mxu0 %v604
  %643 = vmatprep.subr.bf16.mxu0 %v609
  %644 = vmatpush1.bf16.msra.mxu0 %v608
  %645 = vmatprep.subr.bf16.mxu0 %v613
  %646 = vmatpush1.bf16.msra.mxu0 %v612
  %647 = vmatprep.subr.bf16.mxu0 0
  %648 = vmatpush1.bf16.msra.mxu0 0
  %649 = vmatprep.subr.bf16.mxu0 0
  %650 = vmatpush1.bf16.msra.mxu0 0
  %651 = vmatprep.subr.bf16.mxu0 0
  %652 = vmatpush1.bf16.msra.mxu0 0
  %653 = vmatprep.subr.bf16.mxu0 0
  %654 = vmatpush1.bf16.msra.mxu0 0
  %655 = vmatprep.subr.bf16.mxu0 0
  %656 = vmatpush1.bf16.msra.mxu0 0
  %657 = vmatprep.subr.bf16.mxu0 0
  %658 = vmatpush1.bf16.msra.mxu0 0
  %659 = vmatprep.subr.bf16.mxu0 0
  %660 = vmatpush1.bf16.msra.mxu0 0
  %661 = vmatprep.mubr.bf16.mxu0 %v627
  %662 = vmatmul.mubr.bf16.gmra.mrb[0].mxu0 %v622
  %v663 = vpop.f32.mrb[0].mxu0
  %v664 = vadd.f32 0.0, %v663
  %v665 = vpop.f32.mrb[0].mxu0
  %v666 = vadd.f32 0.0, %v665
  %v667 = vpop.f32.mrb[0].mxu0
  %v668 = vadd.f32 0.0, %v667
  %v669 = vpop.f32.mrb[0].mxu0
  %v670 = vadd.f32 0.0, %v669
  %671 = vdwg.mxu0
  %672 = vmatprep.subr.bf16.mxu0 %v583
  %673 = vmatpush1.bf16.msra.mxu0 %v582
  %674 = vmatprep.subr.bf16.mxu0 %v587
  %675 = vmatpush1.bf16.msra.mxu0 %v586
  %676 = vmatprep.subr.bf16.mxu0 %v591
  %677 = vmatpush1.bf16.msra.mxu0 %v590
  %678 = vmatprep.subr.bf16.mxu0 %v595
  %679 = vmatpush1.bf16.msra.mxu0 %v594
  %680 = vmatprep.subr.bf16.mxu0 %v599
  %681 = vmatpush1.bf16.msra.mxu0 %v598
  %682 = vmatprep.subr.bf16.mxu0 %v603
  %683 = vmatpush1.bf16.msra.mxu0 %v602
  %684 = vmatprep.subr.bf16.mxu0 %v607
  %685 = vmatpush1.bf16.msra.mxu0 %v606
  %686 = vmatprep.subr.bf16.mxu0 %v611
  %687 = vmatpush1.bf16.msra.mxu0 %v610
  %688 = vmatprep.subr.bf16.mxu0 %v615
  %689 = vmatpush1.bf16.msra.mxu0 %v614
  %690 = vmatprep.subr.bf16.mxu0 0
  %691 = vmatpush1.bf16.msra.mxu0 0
  %692 = vmatprep.subr.bf16.mxu0 0
  %693 = vmatpush1.bf16.msra.mxu0 0
  %694 = vmatprep.subr.bf16.mxu0 0
  %695 = vmatpush1.bf16.msra.mxu0 0
  %696 = vmatprep.subr.bf16.mxu0 0
  %697 = vmatpush1.bf16.msra.mxu0 0
  %698 = vmatprep.subr.bf16.mxu0 0
  %699 = vmatpush1.bf16.msra.mxu0 0
  %700 = vmatprep.subr.bf16.mxu0 0
  %701 = vmatpush1.bf16.msra.mxu0 0
  %702 = vmatprep.subr.bf16.mxu0 0
  %703 = vmatpush1.bf16.msra.mxu0 0
  %704 = vmatprep.mubr.bf16.mxu0 %v627
  %705 = vmatmul.mubr.bf16.gmra.mrb[0].mxu0 %v622
  %v706 = vpop.f32.mrb[0].mxu0
  %v707 = vadd.f32 0.0, %v706
  %v708 = vpop.f32.mrb[0].mxu0
  %v709 = vadd.f32 0.0, %v708
  %v710 = vpop.f32.mrb[0].mxu0
  %v711 = vadd.f32 0.0, %v710
  %v712 = vpop.f32.mrb[0].mxu0
  %v713 = vadd.f32 0.0, %v712
  %714 = vdwg.mxu0
  %v715 = vpack.c.bf16 %v668, %v664
  %v716 = vpack.c.bf16 %v670, %v666
  %v717 = vpack.c.bf16 %v711, %v707
  %v718 = vpack.c.bf16 %v713, %v709
  %v723 = vunpack.c.l.b16 %v715
  %v724 = vunpack.c.l.b16 %v716
  %v725 = vunpack.c.l.b16 %v717
  %v726 = vunpack.c.l.b16 %v718
  %v727 = vunpack.c.h.b16 %v715
  %v728 = vunpack.c.h.b16 %v716
  %v729 = vunpack.c.h.b16 %v717
  %v730 = vunpack.c.h.b16 %v718
  %v731 = vpack.c.b16 %v724, %v723
  %v732 = vpack.c.b16 %v726, %v725
  %v733 = vpack.c.b16 %v728, %v727
  %v734 = vpack.c.b16 %v730, %v729
  %739 = vst [vmem:[%s3] sm:$0xff] %v731
  %740 = vst [vmem:[%s3 + $0x8] sm:$0xff] %v732
  %741 = vst [vmem:[%s3 + $0x10] sm:$0xff] %v733
  %742 = vst [vmem:[%s3 + $0x18] sm:$0xff] %v734
  %v743 = vadd.f32 %v664, %v666
  %v744 = vadd.f32 %v743, %v707
  %v745 = vadd.f32 %v744, %v709
  %746 = vadd.xlane.f32.xlu0 %v745
  %v747 = vpop.xlane.xlu0 %746
  %v748 = vadd.f32 %v668, %v670
  %v749 = vadd.f32 %v748, %v711
  %v750 = vadd.f32 %v749, %v713
  %751 = vadd.xlane.f32.xlu0 %v750
  %v752 = vpop.xlane.xlu0 %751
  %vm753 = vcmask 7168
  %754 = vst.msk [vmem:[%s4] sm:$0xff] %vm753, %v747
  %755 = vst.msk [vmem:[%s4 + $0x8] sm:$0xff] %vm753, %v752
  %v756 = vmul.f32 %v664, %v664
  %v757 = vmul.f32 %v666, %v666
  %v758 = vmul.f32 %v707, %v707
  %v759 = vmul.f32 %v709, %v709
  %v760 = vmul.f32 %v668, %v668
  %v761 = vmul.f32 %v670, %v670
  %v762 = vmul.f32 %v711, %v711
  %v763 = vmul.f32 %v713, %v713
  %v764 = vadd.f32 %v756, %v757
  %v765 = vadd.f32 %v764, %v758
  %v766 = vadd.f32 %v765, %v759
  %767 = vadd.xlane.f32.xlu0 %v766
  %v768 = vpop.xlane.xlu0 %767
  %v769 = vadd.f32 %v760, %v761
  %v770 = vadd.f32 %v769, %v762
  %v771 = vadd.f32 %v770, %v763
  %772 = vadd.xlane.f32.xlu0 %v771
  %v773 = vpop.xlane.xlu0 %772
  %774 = vst.msk [vmem:[%s5] sm:$0xff] %vm753, %v768
  %775 = vst.msk [vmem:[%s5 + $0x8] sm:$0xff] %vm753, %v773
  // Predicated region
  $region14: #{midscope_conv2d.3} parent=0 // pred_check
    _
  $region15: #{midscope_conv2d.3} parent=0 // pred_check_branch
    %777 = sbr.rel (0) target = $region17
  $region16: #{midscope_conv2d.3} parent=0 // pred_region
    _
  $region17: #{midscope_conv2d.3} parent=0 // pred_fallthru
    _
  // Predicated region
  $region18: #{midscope_conv2d.3} parent=0 // pred_check
    _
  $region19: #{midscope_conv2d.3} parent=0 // pred_check_branch
    %779 = sbr.rel (0) target = $region21
  $region20: #{midscope_conv2d.3} parent=0 // pred_region
    _
  $region21: #{midscope_conv2d.3} parent=0 // pred_fallthru
    _
  // Predicated region
  $region22: #{midscope_conv2d.3} parent=0 // pred_check
    _
  $region23: #{midscope_conv2d.3} parent=0 // pred_check_branch
    %781 = sbr.rel (0) target = $region25
  $region24: #{midscope_conv2d.3} parent=0 // pred_region
    _
  $region25: #{midscope_conv2d.3} parent=0 // pred_fallthru
    _
  // Predicated region
  $region26: #{midscope_conv2d.3} parent=0 // pred_check
    _
  $region27: #{midscope_conv2d.3} parent=0 // pred_check_branch
    %783 = sbr.rel (0) target = $region29
  $region28: #{midscope_conv2d.3} parent=0 // pred_region
    _
  $region29: #{midscope_conv2d.3} parent=0 // pred_fallthru
    _
  // Predicated region
  $region30: #{midscope_conv2d.3} parent=0 // pred_check
    _
  $region31: #{midscope_conv2d.3} parent=0 // pred_check_branch
    %785 = sbr.rel (0) target = $region33
  $region32: #{midscope_conv2d.3} parent=0 // pred_region
    _
  $region33: #{midscope_conv2d.3} parent=0 // pred_fallthru
    _
  // Predicated region
  $region34: #{midscope_conv2d.3} parent=0 // pred_check
    _
  $region35: #{midscope_conv2d.3} parent=0 // pred_check_branch
    %787 = sbr.rel (0) target = $region37
  $region36: #{midscope_conv2d.3} parent=0 // pred_region
    _
  $region37: #{midscope_conv2d.3} parent=0 // pred_fallthru
    _

// kernel: midscope_conv2d.4
$region0: #{midscope_conv2d.4}
  #allocation0 [shape = 'u32[]', space=smem, size = 0x4, offset = 0x4, fixed_abs, tag = 'smem constant byte address 0x4 - core index']
  #allocation1 [shape = 'u32[144,128]{1,0:T(1,128)}', space=vmem, size = 0x12000, scoped, tag = 'internal scratch']
  #allocation2 [shape = 'bf16[144,512]{1,0:T(16,128)(2,1)}', space=vmem, size = 0x24000, scoped, tag = 'scratch operand']
  %s0 = inlined_call_operand.vmem [shape: bf16[16,512], index: 0, kind: input, shape index: {}]
  %s1 = inlined_call_operand.vmem [shape: f32[16,1], index: 1, kind: input, shape index: {}]
  %s2 = inlined_call_operand.vmem [shape: f32[16,1], index: 2, kind: input, shape index: {}]
  %s3 = inlined_call_operand.vmem [shape: bf16[16,144], index: 3, kind: input, shape index: {}]
  %s4 = inlined_call_operand.vmem [shape: f32[9,512], index: 4, kind: input, shape index: {}]
  %s5 = inlined_call_operand.vmem [shape: bf16[16,512], index: 5, kind: output, shape index: {0}]
  %s6 = inlined_call_operand.vmem [shape: f32[1,16,1], index: 6, kind: output, shape index: {1}]
  %s7 = inlined_call_operand.vmem [shape: f32[1,16,1], index: 7, kind: output, shape index: {2}]
  %8 = xla_tuple %s5, %s6, %s7
  %s9 = sld [smem:[#allocation0]]
  $region46: #{midscope_conv2d.4} parent=0
    _
  %s11 = ssub.s32 1, %s9
  %s12 = scalar_select 0, %s11, %s9
  // Predicated region
  $region2: #{midscope_conv2d.4} parent=0 // pred_check
    _
  $region3: #{midscope_conv2d.4} parent=0 // pred_check_branch
    %14 = sbr.rel (0) target = $region5
  $region4: #{midscope_conv2d.4} parent=0 // pred_region
    _
  $region5: #{midscope_conv2d.4} parent=0 // pred_fallthru
    _
  // Predicated region
  $region6: #{midscope_conv2d.4} parent=0 // pred_check
    _
  $region7: #{midscope_conv2d.4} parent=0 // pred_check_branch
    %16 = sbr.rel (0) target = $region9
  $region8: #{midscope_conv2d.4} parent=0 // pred_region
    _
  $region9: #{midscope_conv2d.4} parent=0 // pred_fallthru
    _
  // Predicated region
  $region10: #{midscope_conv2d.4} parent=0 // pred_check
    _
  $region11: #{midscope_conv2d.4} parent=0 // pred_check_branch
    %18 = sbr.rel (0) target = $region13
  $region12: #{midscope_conv2d.4} parent=0 // pred_region
    _
  $region13: #{midscope_conv2d.4} parent=0 // pred_fallthru
    _
  // Predicated region
  $region14: #{midscope_conv2d.4} parent=0 // pred_check
    _
  $region15: #{midscope_conv2d.4} parent=0 // pred_check_branch
    %20 = sbr.rel (0) target = $region17
  $region16: #{midscope_conv2d.4} parent=0 // pred_region
    _
  $region17: #{midscope_conv2d.4} parent=0 // pred_fallthru
    _
  // Predicated region
  $region18: #{midscope_conv2d.4} parent=0 // pred_check
    _
  $region19: #{midscope_conv2d.4} parent=0 // pred_check_branch
    %22 = sbr.rel (0) target = $region21
  $region20: #{midscope_conv2d.4} parent=0 // pred_region
    _
  $region21: #{midscope_conv2d.4} parent=0 // pred_fallthru
    _
  %v24 = vld [vmem:[%s0] sm:$0xff]
  %v25 = vld [vmem:[%s0 + $0x8] sm:$0xff]
  %v26 = vld [vmem:[%s0 + $0x10] sm:$0xff]
  %v27 = vld [vmem:[%s0 + $0x18] sm:$0xff]
  %v28 = vunpack.c.l.bf16 %v24
  %v29 = vunpack.c.h.bf16 %v24
  %v30 = vunpack.c.l.bf16 %v25
  %v31 = vunpack.c.h.bf16 %v25
  %v32 = vunpack.c.l.bf16 %v26
  %v33 = vunpack.c.h.bf16 %v26
  %v34 = vunpack.c.l.bf16 %v27
  %v35 = vunpack.c.h.bf16 %v27
  %v36 = vld [vmem:[%s1] sm:$0xff]
  %v37 = vld [vmem:[%s1 + $0x8] sm:$0xff]
  %39 = vset.pattern.permute.xlu0 0
  %40 = vperm.xlu0 %39, %v36
  %v41 = vpop.permute.xlu0 %40
  %44 = vset.pattern.permute.xlu0 0
  %45 = vperm.xlu0 %44, %v37
  %v46 = vpop.permute.xlu0 %45
  %v48 = vmul.f32 %v28, %v41
  %v49 = vmul.f32 %v29, %v41
  %v50 = vmul.f32 %v30, %v41
  %v51 = vmul.f32 %v31, %v41
  %v52 = vmul.f32 %v32, %v46
  %v53 = vmul.f32 %v33, %v46
  %v54 = vmul.f32 %v34, %v46
  %v55 = vmul.f32 %v35, %v46
  %v56 = vld [vmem:[%s2] sm:$0xff]
  %v57 = vld [vmem:[%s2 + $0x8] sm:$0xff]
  %59 = vset.pattern.permute.xlu0 0
  %60 = vperm.xlu0 %59, %v56
  %v61 = vpop.permute.xlu0 %60
  %64 = vset.pattern.permute.xlu0 0
  %65 = vperm.xlu0 %64, %v57
  %v66 = vpop.permute.xlu0 %65
  %v68 = vadd.f32 %v48, %v61
  %v69 = vadd.f32 %v49, %v61
  %v70 = vadd.f32 %v50, %v61
  %v71 = vadd.f32 %v51, %v61
  %v72 = vadd.f32 %v52, %v66
  %v73 = vadd.f32 %v53, %v66
  %v74 = vadd.f32 %v54, %v66
  %v75 = vadd.f32 %v55, %v66
  %v76 = vmax.f32 %v68, 0.0
  %v77 = vmax.f32 %v69, 0.0
  %v78 = vmax.f32 %v70, 0.0
  %v79 = vmax.f32 %v71, 0.0
  %v80 = vmax.f32 %v72, 0.0
  %v81 = vmax.f32 %v73, 0.0
  %v82 = vmax.f32 %v74, 0.0
  %v83 = vmax.f32 %v75, 0.0
  %84 = vrot.lane.b32.xlu0 %v76, 34
  %v85 = vpop.permute.xlu0 %84
  %86 = vrot.lane.b32.xlu0 %v80, 34
  %v87 = vpop.permute.xlu0 %86
  %88 = vrot.lane.b32.xlu0 %v77, 34
  %v89 = vpop.permute.xlu0 %88
  %90 = vrot.lane.b32.xlu0 %v81, 34
  %v91 = vpop.permute.xlu0 %90
  %92 = vrot.lane.b32.xlu0 %v78, 34
  %v93 = vpop.permute.xlu0 %92
  %94 = vrot.lane.b32.xlu0 %v82, 34
  %v95 = vpop.permute.xlu0 %94
  %96 = vrot.lane.b32.xlu0 %v79, 34
  %v97 = vpop.permute.xlu0 %96
  %98 = vrot.lane.b32.xlu0 %v83, 34
  %v99 = vpop.permute.xlu0 %98
  %v100 = vlaneseq
  %v101 = vand.u32 %v100, 127
  %vm102 = vcmp.lt.s32.totalorder %v101, 34
  %v103 = vsel %vm102, %v93, %v97
  %v104 = vsel %vm102, %v95, %v99
  %v105 = vsel %vm102, %v89, %v93
  %v106 = vsel %vm102, %v91, %v95
  %v107 = vsel %vm102, %v85, %v89
  %v108 = vsel %vm102, %v87, %v91
  %v109 = vsel %vm102, %v97, %v85
  %v110 = vsel %vm102, %v99, %v87
  %v111 = vld [vmem:[%s4] ss:$8 sm:$0xf]
  %v113 = vlaneseq
  %v114 = vshrl.u32 %v113, 7
  %v115 = vsub.s32 0, %v114
  %v116 = vrot.slane %v111, %v115
  %v117 = vlaneseq
  %v118 = vshrl.u32 %v117, 7
  %v119 = vsub.s32 1, %v118
  %v120 = vrot.slane %v111, %v119
  %v121 = vlaneseq
  %v122 = vshrl.u32 %v121, 7
  %v123 = vsub.s32 2, %v122
  %v124 = vrot.slane %v111, %v123
  %v125 = vlaneseq
  %v126 = vshrl.u32 %v125, 7
  %v127 = vsub.s32 3, %v126
  %v128 = vrot.slane %v111, %v127
  %v133 = vmul.f32 %v109, %v116
  %v134 = vmul.f32 %v107, %v120
  %v135 = vmul.f32 %v105, %v124
  %v136 = vmul.f32 %v103, %v128
  %v137 = vmul.f32 %v110, %v116
  %v138 = vmul.f32 %v108, %v120
  %v139 = vmul.f32 %v106, %v124
  %v140 = vmul.f32 %v104, %v128
  %v141 = vpack.c.bf16 %v137, %v133
  %v142 = vpack.c.bf16 %v138, %v134
  %v143 = vpack.c.bf16 %v139, %v135
  %v144 = vpack.c.bf16 %v140, %v136
  %145 = vst [vmem:[#allocation2] sm:$0xff] %v141
  %146 = vst [vmem:[#allocation2 + $0x8] sm:$0xff] %v142
  %147 = vst [vmem:[#allocation2 + $0x10] sm:$0xff] %v143
  %148 = vst [vmem:[#allocation2 + $0x18] sm:$0xff] %v144
  %149 = vrot.lane.b32.xlu0 %v76, 32
  %v150 = vpop.permute.xlu0 %149
  %151 = vrot.lane.b32.xlu0 %v80, 32
  %v152 = vpop.permute.xlu0 %151
  %153 = vrot.lane.b32.xlu0 %v77, 32
  %v154 = vpop.permute.xlu0 %153
  %155 = vrot.lane.b32.xlu0 %v81, 32
  %v156 = vpop.permute.xlu0 %155
  %157 = vrot.lane.b32.xlu0 %v78, 32
  %v158 = vpop.permute.xlu0 %157
  %159 = vrot.lane.b32.xlu0 %v82, 32
  %v160 = vpop.permute.xlu0 %159
  %161 = vrot.lane.b32.xlu0 %v79, 32
  %v162 = vpop.permute.xlu0 %161
  %163 = vrot.lane.b32.xlu0 %v83, 32
  %v164 = vpop.permute.xlu0 %163
  %vm165 = vcmp.lt.s32.totalorder %v101, 32
  %v166 = vsel %vm165, %v158, %v162
  %v167 = vsel %vm165, %v160, %v164
  %v168 = vsel %vm165, %v154, %v158
  %v169 = vsel %vm165, %v156, %v160
  %v170 = vsel %vm165, %v150, %v154
  %v171 = vsel %vm165, %v152, %v156
  %v172 = vsel %vm165, %v162, %v150
  %v173 = vsel %vm165, %v164, %v152
  %s174 = scalar_lea.vmem %s4, 1
  %v175 = vld [vmem:[%s174] ss:$8 sm:$0xf]
  %v177 = vlaneseq
  %v178 = vshrl.u32 %v177, 7
  %v179 = vsub.s32 0, %v178
  %v180 = vrot.slane %v175, %v179
  %v181 = vlaneseq
  %v182 = vshrl.u32 %v181, 7
  %v183 = vsub.s32 1, %v182
  %v184 = vrot.slane %v175, %v183
  %v185 = vlaneseq
  %v186 = vshrl.u32 %v185, 7
  %v187 = vsub.s32 2, %v186
  %v188 = vrot.slane %v175, %v187
  %v189 = vlaneseq
  %v190 = vshrl.u32 %v189, 7
  %v191 = vsub.s32 3, %v190
  %v192 = vrot.slane %v175, %v191
  %v197 = vmul.f32 %v172, %v180
  %v198 = vmul.f32 %v170, %v184
  %v199 = vmul.f32 %v168, %v188
  %v200 = vmul.f32 %v166, %v192
  %v201 = vmul.f32 %v173, %v180
  %v202 = vmul.f32 %v171, %v184
  %v203 = vmul.f32 %v169, %v188
  %v204 = vmul.f32 %v167, %v192
  %v205 = vpack.c.bf16 %v201, %v197
  %v206 = vpack.c.bf16 %v202, %v198
  %v207 = vpack.c.bf16 %v203, %v199
  %v208 = vpack.c.bf16 %v204, %v200
  %209 = vst [vmem:[#allocation2 + $0x20] sm:$0xff] %v205
  %210 = vst [vmem:[#allocation2 + $0x28] sm:$0xff] %v206
  %211 = vst [vmem:[#allocation2 + $0x30] sm:$0xff] %v207
  %212 = vst [vmem:[#allocation2 + $0x38] sm:$0xff] %v208
  %213 = vrot.lane.b32.xlu0 %v76, 30
  %v214 = vpop.permute.xlu0 %213
  %215 = vrot.lane.b32.xlu0 %v80, 30
  %v216 = vpop.permute.xlu0 %215
  %217 = vrot.lane.b32.xlu0 %v77, 30
  %v218 = vpop.permute.xlu0 %217
  %219 = vrot.lane.b32.xlu0 %v81, 30
  %v220 = vpop.permute.xlu0 %219
  %221 = vrot.lane.b32.xlu0 %v78, 30
  %v222 = vpop.permute.xlu0 %221
  %223 = vrot.lane.b32.xlu0 %v82, 30
  %v224 = vpop.permute.xlu0 %223
  %225 = vrot.lane.b32.xlu0 %v79, 30
  %v226 = vpop.permute.xlu0 %225
  %227 = vrot.lane.b32.xlu0 %v83, 30
  %v228 = vpop.permute.xlu0 %227
  %vm229 = vcmp.lt.s32.totalorder %v101, 30
  %v230 = vsel %vm229, %v222, %v226
  %v231 = vsel %vm229, %v224, %v228
  %v232 = vsel %vm229, %v218, %v222
  %v233 = vsel %vm229, %v220, %v224
  %v234 = vsel %vm229, %v214, %v218
  %v235 = vsel %vm229, %v216, %v220
  %v236 = vsel %vm229, %v226, %v214
  %v237 = vsel %vm229, %v228, %v216
  %s238 = scalar_lea.vmem %s4, 2
  %v239 = vld [vmem:[%s238] ss:$8 sm:$0xf]
  %v241 = vlaneseq
  %v242 = vshrl.u32 %v241, 7
  %v243 = vsub.s32 0, %v242
  %v244 = vrot.slane %v239, %v243
  %v245 = vlaneseq
  %v246 = vshrl.u32 %v245, 7
  %v247 = vsub.s32 1, %v246
  %v248 = vrot.slane %v239, %v247
  %v249 = vlaneseq
  %v250 = vshrl.u32 %v249, 7
  %v251 = vsub.s32 2, %v250
  %v252 = vrot.slane %v239, %v251
  %v253 = vlaneseq
  %v254 = vshrl.u32 %v253, 7
  %v255 = vsub.s32 3, %v254
  %v256 = vrot.slane %v239, %v255
  %v261 = vmul.f32 %v236, %v244
  %v262 = vmul.f32 %v234, %v248
  %v263 = vmul.f32 %v232, %v252
  %v264 = vmul.f32 %v230, %v256
  %v265 = vmul.f32 %v237, %v244
  %v266 = vmul.f32 %v235, %v248
  %v267 = vmul.f32 %v233, %v252
  %v268 = vmul.f32 %v231, %v256
  %v269 = vpack.c.bf16 %v265, %v261
  %v270 = vpack.c.bf16 %v266, %v262
  %v271 = vpack.c.bf16 %v267, %v263
  %v272 = vpack.c.bf16 %v268, %v264
  %273 = vst [vmem:[#allocation2 + $0x40] sm:$0xff] %v269
  %274 = vst [vmem:[#allocation2 + $0x48] sm:$0xff] %v270
  %275 = vst [vmem:[#allocation2 + $0x50] sm:$0xff] %v271
  %276 = vst [vmem:[#allocation2 + $0x58] sm:$0xff] %v272
  %277 = vrot.lane.b32.xlu0 %v76, 2
  %v278 = vpop.permute.xlu0 %277
  %279 = vrot.lane.b32.xlu0 %v80, 2
  %v280 = vpop.permute.xlu0 %279
  %281 = vrot.lane.b32.xlu0 %v77, 2
  %v282 = vpop.permute.xlu0 %281
  %283 = vrot.lane.b32.xlu0 %v81, 2
  %v284 = vpop.permute.xlu0 %283
  %285 = vrot.lane.b32.xlu0 %v78, 2
  %v286 = vpop.permute.xlu0 %285
  %287 = vrot.lane.b32.xlu0 %v82, 2
  %v288 = vpop.permute.xlu0 %287
  %289 = vrot.lane.b32.xlu0 %v79, 2
  %v290 = vpop.permute.xlu0 %289
  %291 = vrot.lane.b32.xlu0 %v83, 2
  %v292 = vpop.permute.xlu0 %291
  %vm293 = vcmp.lt.s32.totalorder %v101, 2
  %v294 = vsel %vm293, %v286, %v290
  %v295 = vsel %vm293, %v288, %v292
  %v296 = vsel %vm293, %v282, %v286
  %v297 = vsel %vm293, %v284, %v288
  %v298 = vsel %vm293, %v278, %v282
  %v299 = vsel %vm293, %v280, %v284
  %v300 = vsel %vm293, %v290, %v278
  %v301 = vsel %vm293, %v292, %v280
  %s302 = scalar_lea.vmem %s4, 3
  %v303 = vld [vmem:[%s302] ss:$8 sm:$0xf]
  %v305 = vlaneseq
  %v306 = vshrl.u32 %v305, 7
  %v307 = vsub.s32 0, %v306
  %v308 = vrot.slane %v303, %v307
  %v309 = vlaneseq
  %v310 = vshrl.u32 %v309, 7
  %v311 = vsub.s32 1, %v310
  %v312 = vrot.slane %v303, %v311
  %v313 = vlaneseq
  %v314 = vshrl.u32 %v313, 7
  %v315 = vsub.s32 2, %v314
  %v316 = vrot.slane %v303, %v315
  %v317 = vlaneseq
  %v318 = vshrl.u32 %v317, 7
  %v319 = vsub.s32 3, %v318
  %v320 = vrot.slane %v303, %v319
  %v325 = vmul.f32 %v300, %v308
  %v326 = vmul.f32 %v298, %v312
  %v327 = vmul.f32 %v296, %v316
  %v328 = vmul.f32 %v294, %v320
  %v329 = vmul.f32 %v301, %v308
  %v330 = vmul.f32 %v299, %v312
  %v331 = vmul.f32 %v297, %v316
  %v332 = vmul.f32 %v295, %v320
  %v333 = vpack.c.bf16 %v329, %v325
  %v334 = vpack.c.bf16 %v330, %v326
  %v335 = vpack.c.bf16 %v331, %v327
  %v336 = vpack.c.bf16 %v332, %v328
  %337 = vst [vmem:[#allocation2 + $0x60] sm:$0xff] %v333
  %338 = vst [vmem:[#allocation2 + $0x68] sm:$0xff] %v334
  %339 = vst [vmem:[#allocation2 + $0x70] sm:$0xff] %v335
  %340 = vst [vmem:[#allocation2 + $0x78] sm:$0xff] %v336
  %s341 = scalar_lea.vmem %s4, 4
  %v342 = vld [vmem:[%s341] ss:$8 sm:$0xf]
  %v344 = vlaneseq
  %v345 = vshrl.u32 %v344, 7
  %v346 = vsub.s32 0, %v345
  %v347 = vrot.slane %v342, %v346
  %v348 = vlaneseq
  %v349 = vshrl.u32 %v348, 7
  %v350 = vsub.s32 1, %v349
  %v351 = vrot.slane %v342, %v350
  %v352 = vlaneseq
  %v353 = vshrl.u32 %v352, 7
  %v354 = vsub.s32 2, %v353
  %v355 = vrot.slane %v342, %v354
  %v356 = vlaneseq
  %v357 = vshrl.u32 %v356, 7
  %v358 = vsub.s32 3, %v357
  %v359 = vrot.slane %v342, %v358
  %v364 = vmul.f32 %v76, %v347
  %v365 = vmul.f32 %v77, %v351
  %v366 = vmul.f32 %v78, %v355
  %v367 = vmul.f32 %v79, %v359
  %v368 = vmul.f32 %v80, %v347
  %v369 = vmul.f32 %v81, %v351
  %v370 = vmul.f32 %v82, %v355
  %v371 = vmul.f32 %v83, %v359
  %v372 = vpack.c.bf16 %v368, %v364
  %v373 = vpack.c.bf16 %v369, %v365
  %v374 = vpack.c.bf16 %v370, %v366
  %v375 = vpack.c.bf16 %v371, %v367
  %376 = vst [vmem:[#allocation2 + $0x80] sm:$0xff] %v372
  %377 = vst [vmem:[#allocation2 + $0x88] sm:$0xff] %v373
  %378 = vst [vmem:[#allocation2 + $0x90] sm:$0xff] %v374
  %379 = vst [vmem:[#allocation2 + $0x98] sm:$0xff] %v375
  %380 = vrot.lane.b32.xlu0 %v76, 126
  %v381 = vpop.permute.xlu0 %380
  %382 = vrot.lane.b32.xlu0 %v80, 126
  %v383 = vpop.permute.xlu0 %382
  %384 = vrot.lane.b32.xlu0 %v77, 126
  %v385 = vpop.permute.xlu0 %384
  %386 = vrot.lane.b32.xlu0 %v81, 126
  %v387 = vpop.permute.xlu0 %386
  %388 = vrot.lane.b32.xlu0 %v78, 126
  %v389 = vpop.permute.xlu0 %388
  %390 = vrot.lane.b32.xlu0 %v82, 126
  %v391 = vpop.permute.xlu0 %390
  %392 = vrot.lane.b32.xlu0 %v79, 126
  %v393 = vpop.permute.xlu0 %392
  %394 = vrot.lane.b32.xlu0 %v83, 126
  %v395 = vpop.permute.xlu0 %394
  %vm396 = vcmp.lt.s32.totalorder %v101, 126
  %v397 = vsel %vm396, %v389, %v393
  %v398 = vsel %vm396, %v391, %v395
  %v399 = vsel %vm396, %v385, %v389
  %v400 = vsel %vm396, %v387, %v391
  %v401 = vsel %vm396, %v381, %v385
  %v402 = vsel %vm396, %v383, %v387
  %v403 = vsel %vm396, %v393, %v381
  %v404 = vsel %vm396, %v395, %v383
  %s405 = scalar_lea.vmem %s4, 5
  %v406 = vld [vmem:[%s405] ss:$8 sm:$0xf]
  %v408 = vlaneseq
  %v409 = vshrl.u32 %v408, 7
  %v410 = vsub.s32 0, %v409
  %v411 = vrot.slane %v406, %v410
  %v412 = vlaneseq
  %v413 = vshrl.u32 %v412, 7
  %v414 = vsub.s32 1, %v413
  %v415 = vrot.slane %v406, %v414
  %v416 = vlaneseq
  %v417 = vshrl.u32 %v416, 7
  %v418 = vsub.s32 2, %v417
  %v419 = vrot.slane %v406, %v418
  %v420 = vlaneseq
  %v421 = vshrl.u32 %v420, 7
  %v422 = vsub.s32 3, %v421
  %v423 = vrot.slane %v406, %v422
  %v428 = vmul.f32 %v401, %v411
  %v429 = vmul.f32 %v399, %v415
  %v430 = vmul.f32 %v397, %v419
  %v431 = vmul.f32 %v403, %v423
  %v432 = vmul.f32 %v402, %v411
  %v433 = vmul.f32 %v400, %v415
  %v434 = vmul.f32 %v398, %v419
  %v435 = vmul.f32 %v404, %v423
  %v436 = vpack.c.bf16 %v432, %v428
  %v437 = vpack.c.bf16 %v433, %v429
  %v438 = vpack.c.bf16 %v434, %v430
  %v439 = vpack.c.bf16 %v435, %v431
  %440 = vst [vmem:[#allocation2 + $0xa0] sm:$0xff] %v436
  %441 = vst [vmem:[#allocation2 + $0xa8] sm:$0xff] %v437
  %442 = vst [vmem:[#allocation2 + $0xb0] sm:$0xff] %v438
  %443 = vst [vmem:[#allocation2 + $0xb8] sm:$0xff] %v439
  %444 = vrot.lane.b32.xlu0 %v76, 98
  %v445 = vpop.permute.xlu0 %444
  %446 = vrot.lane.b32.xlu0 %v80, 98
  %v447 = vpop.permute.xlu0 %446
  %448 = vrot.lane.b32.xlu0 %v77, 98
  %v449 = vpop.permute.xlu0 %448
  %450 = vrot.lane.b32.xlu0 %v81, 98
  %v451 = vpop.permute.xlu0 %450
  %452 = vrot.lane.b32.xlu0 %v78, 98
  %v453 = vpop.permute.xlu0 %452
  %454 = vrot.lane.b32.xlu0 %v82, 98
  %v455 = vpop.permute.xlu0 %454
  %456 = vrot.lane.b32.xlu0 %v79, 98
  %v457 = vpop.permute.xlu0 %456
  %458 = vrot.lane.b32.xlu0 %v83, 98
  %v459 = vpop.permute.xlu0 %458
  %vm460 = vcmp.lt.s32.totalorder %v101, 98
  %v461 = vsel %vm460, %v453, %v457
  %v462 = vsel %vm460, %v455, %v459
  %v463 = vsel %vm460, %v449, %v453
  %v464 = vsel %vm460, %v451, %v455
  %v465 = vsel %vm460, %v445, %v449
  %v466 = vsel %vm460, %v447, %v451
  %v467 = vsel %vm460, %v457, %v445
  %v468 = vsel %vm460, %v459, %v447
  %s469 = scalar_lea.vmem %s4, 6
  %v470 = vld [vmem:[%s469] ss:$8 sm:$0xf]
  %v472 = vlaneseq
  %v473 = vshrl.u32 %v472, 7
  %v474 = vsub.s32 0, %v473
  %v475 = vrot.slane %v470, %v474
  %v476 = vlaneseq
  %v477 = vshrl.u32 %v476, 7
  %v478 = vsub.s32 1, %v477
  %v479 = vrot.slane %v470, %v478
  %v480 = vlaneseq
  %v481 = vshrl.u32 %v480, 7
  %v482 = vsub.s32 2, %v481
  %v483 = vrot.slane %v470, %v482
  %v484 = vlaneseq
  %v485 = vshrl.u32 %v484, 7
  %v486 = vsub.s32 3, %v485
  %v487 = vrot.slane %v470, %v486
  %v492 = vmul.f32 %v465, %v475
  %v493 = vmul.f32 %v463, %v479
  %v494 = vmul.f32 %v461, %v483
  %v495 = vmul.f32 %v467, %v487
  %v496 = vmul.f32 %v466, %v475
  %v497 = vmul.f32 %v464, %v479
  %v498 = vmul.f32 %v462, %v483
  %v499 = vmul.f32 %v468, %v487
  %v500 = vpack.c.bf16 %v496, %v492
  %v501 = vpack.c.bf16 %v497, %v493
  %v502 = vpack.c.bf16 %v498, %v494
  %v503 = vpack.c.bf16 %v499, %v495
  %504 = vst [vmem:[#allocation2 + $0xc0] sm:$0xff] %v500
  %505 = vst [vmem:[#allocation2 + $0xc8] sm:$0xff] %v501
  %506 = vst [vmem:[#allocation2 + $0xd0] sm:$0xff] %v502
  %507 = vst [vmem:[#allocation2 + $0xd8] sm:$0xff] %v503
  %508 = vrot.lane.b32.xlu0 %v76, 96
  %v509 = vpop.permute.xlu0 %508
  %510 = vrot.lane.b32.xlu0 %v80, 96
  %v511 = vpop.permute.xlu0 %510
  %512 = vrot.lane.b32.xlu0 %v77, 96
  %v513 = vpop.permute.xlu0 %512
  %514 = vrot.lane.b32.xlu0 %v81, 96
  %v515 = vpop.permute.xlu0 %514
  %516 = vrot.lane.b32.xlu0 %v78, 96
  %v517 = vpop.permute.xlu0 %516
  %518 = vrot.lane.b32.xlu0 %v82, 96
  %v519 = vpop.permute.xlu0 %518
  %520 = vrot.lane.b32.xlu0 %v79, 96
  %v521 = vpop.permute.xlu0 %520
  %522 = vrot.lane.b32.xlu0 %v83, 96
  %v523 = vpop.permute.xlu0 %522
  %vm524 = vcmp.lt.s32.totalorder %v101, 96
  %v525 = vsel %vm524, %v517, %v521
  %v526 = vsel %vm524, %v519, %v523
  %v527 = vsel %vm524, %v513, %v517
  %v528 = vsel %vm524, %v515, %v519
  %v529 = vsel %vm524, %v509, %v513
  %v530 = vsel %vm524, %v511, %v515
  %v531 = vsel %vm524, %v521, %v509
  %v532 = vsel %vm524, %v523, %v511
  %s533 = scalar_lea.vmem %s4, 7
  %v534 = vld [vmem:[%s533] ss:$8 sm:$0xf]
  %v536 = vlaneseq
  %v537 = vshrl.u32 %v536, 7
  %v538 = vsub.s32 0, %v537
  %v539 = vrot.slane %v534, %v538
  %v540 = vlaneseq
  %v541 = vshrl.u32 %v540, 7
  %v542 = vsub.s32 1, %v541
  %v543 = vrot.slane %v534, %v542
  %v544 = vlaneseq
  %v545 = vshrl.u32 %v544, 7
  %v546 = vsub.s32 2, %v545
  %v547 = vrot.slane %v534, %v546
  %v548 = vlaneseq
  %v549 = vshrl.u32 %v548, 7
  %v550 = vsub.s32 3, %v549
  %v551 = vrot.slane %v534, %v550
  %v556 = vmul.f32 %v529, %v539
  %v557 = vmul.f32 %v527, %v543
  %v558 = vmul.f32 %v525, %v547
  %v559 = vmul.f32 %v531, %v551
  %v560 = vmul.f32 %v530, %v539
  %v561 = vmul.f32 %v528, %v543
  %v562 = vmul.f32 %v526, %v547
  %v563 = vmul.f32 %v532, %v551
  %v564 = vpack.c.bf16 %v560, %v556
  %v565 = vpack.c.bf16 %v561, %v557
  %v566 = vpack.c.bf16 %v562, %v558
  %v567 = vpack.c.bf16 %v563, %v559
  %568 = vst [vmem:[#allocation2 + $0xe0] sm:$0xff] %v564
  %569 = vst [vmem:[#allocation2 + $0xe8] sm:$0xff] %v565
  %570 = vst [vmem:[#allocation2 + $0xf0] sm:$0xff] %v566
  %571 = vst [vmem:[#allocation2 + $0xf8] sm:$0xff] %v567
  %572 = vrot.lane.b32.xlu0 %v76, 94
  %v573 = vpop.permute.xlu0 %572
  %574 = vrot.lane.b32.xlu0 %v80, 94
  %v575 = vpop.permute.xlu0 %574
  %576 = vrot.lane.b32.xlu0 %v77, 94
  %v577 = vpop.permute.xlu0 %576
  %578 = vrot.lane.b32.xlu0 %v81, 94
  %v579 = vpop.permute.xlu0 %578
  %580 = vrot.lane.b32.xlu0 %v78, 94
  %v581 = vpop.permute.xlu0 %580
  %582 = vrot.lane.b32.xlu0 %v82, 94
  %v583 = vpop.permute.xlu0 %582
  %584 = vrot.lane.b32.xlu0 %v79, 94
  %v585 = vpop.permute.xlu0 %584
  %586 = vrot.lane.b32.xlu0 %v83, 94
  %v587 = vpop.permute.xlu0 %586
  %vm588 = vcmp.lt.s32.totalorder %v101, 94
  %v589 = vsel %vm588, %v581, %v585
  %v590 = vsel %vm588, %v583, %v587
  %v591 = vsel %vm588, %v577, %v581
  %v592 = vsel %vm588, %v579, %v583
  %v593 = vsel %vm588, %v573, %v577
  %v594 = vsel %vm588, %v575, %v579
  %v595 = vsel %vm588, %v585, %v573
  %v596 = vsel %vm588, %v587, %v575
  %s597 = scalar_lea.vmem %s4, 32
  %v598 = vld [vmem:[%s597] ss:$8 sm:$0xf]
  %v600 = vlaneseq
  %v601 = vshrl.u32 %v600, 7
  %v602 = vsub.s32 0, %v601
  %v603 = vrot.slane %v598, %v602
  %v604 = vlaneseq
  %v605 = vshrl.u32 %v604, 7
  %v606 = vsub.s32 1, %v605
  %v607 = vrot.slane %v598, %v606
  %v608 = vlaneseq
  %v609 = vshrl.u32 %v608, 7
  %v610 = vsub.s32 2, %v609
  %v611 = vrot.slane %v598, %v610
  %v612 = vlaneseq
  %v613 = vshrl.u32 %v612, 7
  %v614 = vsub.s32 3, %v613
  %v615 = vrot.slane %v598, %v614
  %v620 = vmul.f32 %v593, %v603
  %v621 = vmul.f32 %v591, %v607
  %v622 = vmul.f32 %v589, %v611
  %v623 = vmul.f32 %v595, %v615
  %v624 = vmul.f32 %v594, %v603
  %v625 = vmul.f32 %v592, %v607
  %v626 = vmul.f32 %v590, %v611
  %v627 = vmul.f32 %v596, %v615
  %v628 = vpack.c.bf16 %v624, %v620
  %v629 = vpack.c.bf16 %v625, %v621
  %v630 = vpack.c.bf16 %v626, %v622
  %v631 = vpack.c.bf16 %v627, %v623
  %632 = vst [vmem:[#allocation2 + $0x100] sm:$0xff] %v628
  %633 = vst [vmem:[#allocation2 + $0x108] sm:$0xff] %v629
  %634 = vst [vmem:[#allocation2 + $0x110] sm:$0xff] %v630
  %635 = vst [vmem:[#allocation2 + $0x118] sm:$0xff] %v631
  %v636 = vld [vmem:[%s3] sm:$0xff]
  %v637 = vld [vmem:[%s3 + $0x8] sm:$0xff]
  %v638 = vld [vmem:[#allocation2] sm:$0xff]
  %v639 = vld [vmem:[#allocation2 + $0x8] sm:$0xff]
  %v640 = vld [vmem:[#allocation2 + $0x10] sm:$0xff]
  %v641 = vld [vmem:[#allocation2 + $0x18] sm:$0xff]
  %v642 = vld [vmem:[#allocation2 + $0x20] sm:$0xff]
  %v643 = vld [vmem:[#allocation2 + $0x28] sm:$0xff]
  %v644 = vld [vmem:[#allocation2 + $0x30] sm:$0xff]
  %v645 = vld [vmem:[#allocation2 + $0x38] sm:$0xff]
  %v646 = vld [vmem:[#allocation2 + $0x40] sm:$0xff]
  %v647 = vld [vmem:[#allocation2 + $0x48] sm:$0xff]
  %v648 = vld [vmem:[#allocation2 + $0x50] sm:$0xff]
  %v649 = vld [vmem:[#allocation2 + $0x58] sm:$0xff]
  %v650 = vld [vmem:[#allocation2 + $0x60] sm:$0xff]
  %v651 = vld [vmem:[#allocation2 + $0x68] sm:$0xff]
  %v652 = vld [vmem:[#allocation2 + $0x70] sm:$0xff]
  %v653 = vld [vmem:[#allocation2 + $0x78] sm:$0xff]
  %v654 = vld [vmem:[#allocation2 + $0x80] sm:$0xff]
  %v655 = vld [vmem:[#allocation2 + $0x88] sm:$0xff]
  %v656 = vld [vmem:[#allocation2 + $0x90] sm:$0xff]
  %v657 = vld [vmem:[#allocation2 + $0x98] sm:$0xff]
  %v658 = vld [vmem:[#allocation2 + $0xa0] sm:$0xff]
  %v659 = vld [vmem:[#allocation2 + $0xa8] sm:$0xff]
  %v660 = vld [vmem:[#allocation2 + $0xb0] sm:$0xff]
  %v661 = vld [vmem:[#allocation2 + $0xb8] sm:$0xff]
  %v662 = vld [vmem:[#allocation2 + $0xc0] sm:$0xff]
  %v663 = vld [vmem:[#allocation2 + $0xc8] sm:$0xff]
  %v664 = vld [vmem:[#allocation2 + $0xd0] sm:$0xff]
  %v665 = vld [vmem:[#allocation2 + $0xd8] sm:$0xff]
  %v666 = vld [vmem:[#allocation2 + $0xe0] sm:$0xff]
  %v667 = vld [vmem:[#allocation2 + $0xe8] sm:$0xff]
  %v668 = vld [vmem:[#allocation2 + $0xf0] sm:$0xff]
  %v669 = vld [vmem:[#allocation2 + $0xf8] sm:$0xff]
  %v670 = vld [vmem:[#allocation2 + $0x100] sm:$0xff]
  %v671 = vld [vmem:[#allocation2 + $0x108] sm:$0xff]
  %v672 = vld [vmem:[#allocation2 + $0x110] sm:$0xff]
  %v673 = vld [vmem:[#allocation2 + $0x118] sm:$0xff]
  %v676 = vunpack.c.l.b16 %v636
  %v677 = vunpack.c.h.b16 %v636
  %v678 = vunpack.c.l.b16 %v637
  %v679 = vunpack.c.h.b16 %v637
  %v680 = vpack.c.b16 %v678, %v676
  %v681 = vpack.c.b16 %v679, %v677
  %vm683 = vcmask 130048
  %v685 = vsel %vm683, %v681, 0
  %687 = vmatprep.subr.bf16.mxu0 %v639
  %688 = vmatpush1.bf16.msra.mxu0 %v638
  %689 = vmatprep.subr.bf16.mxu0 %v643
  %690 = vmatpush1.bf16.msra.mxu0 %v642
  %691 = vmatprep.subr.bf16.mxu0 %v647
  %692 = vmatpush1.bf16.msra.mxu0 %v646
  %693 = vmatprep.subr.bf16.mxu0 %v651
  %694 = vmatpush1.bf16.msra.mxu0 %v650
  %695 = vmatprep.subr.bf16.mxu0 %v655
  %696 = vmatpush1.bf16.msra.mxu0 %v654
  %697 = vmatprep.subr.bf16.mxu0 %v659
  %698 = vmatpush1.bf16.msra.mxu0 %v658
  %699 = vmatprep.subr.bf16.mxu0 %v663
  %700 = vmatpush1.bf16.msra.mxu0 %v662
  %701 = vmatprep.subr.bf16.mxu0 %v667
  %702 = vmatpush1.bf16.msra.mxu0 %v666
  %703 = vmatprep.subr.bf16.mxu0 %v671
  %704 = vmatpush1.bf16.msra.mxu0 %v670
  %705 = vmatprep.subr.bf16.mxu0 0
  %706 = vmatpush1.bf16.msra.mxu0 0
  %707 = vmatprep.subr.bf16.mxu0 0
  %708 = vmatpush1.bf16.msra.mxu0 0
  %709 = vmatprep.subr.bf16.mxu0 0
  %710 = vmatpush1.bf16.msra.mxu0 0
  %711 = vmatprep.subr.bf16.mxu0 0
  %712 = vmatpush1.bf16.msra.mxu0 0
  %713 = vmatprep.subr.bf16.mxu0 0
  %714 = vmatpush1.bf16.msra.mxu0 0
  %715 = vmatprep.subr.bf16.mxu0 0
  %716 = vmatpush1.bf16.msra.mxu0 0
  %717 = vmatprep.subr.bf16.mxu0 0
  %718 = vmatpush1.bf16.msra.mxu0 0
  %719 = vmatprep.mubr.bf16.mxu0 %v685
  %720 = vmatmul.mubr.bf16.gmra.mrb[0].mxu0 %v680
  %v721 = vpop.f32.mrb[0].mxu0
  %v722 = vadd.f32 0.0, %v721
  %v723 = vpop.f32.mrb[0].mxu0
  %v724 = vadd.f32 0.0, %v723
  %v725 = vpop.f32.mrb[0].mxu0
  %v726 = vadd.f32 0.0, %v725
  %v727 = vpop.f32.mrb[0].mxu0
  %v728 = vadd.f32 0.0, %v727
  %729 = vdwg.mxu0
  %730 = vmatprep.subr.bf16.mxu0 %v641
  %731 = vmatpush1.bf16.msra.mxu0 %v640
  %732 = vmatprep.subr.bf16.mxu0 %v645
  %733 = vmatpush1.bf16.msra.mxu0 %v644
  %734 = vmatprep.subr.bf16.mxu0 %v649
  %735 = vmatpush1.bf16.msra.mxu0 %v648
  %736 = vmatprep.subr.bf16.mxu0 %v653
  %737 = vmatpush1.bf16.msra.mxu0 %v652
  %738 = vmatprep.subr.bf16.mxu0 %v657
  %739 = vmatpush1.bf16.msra.mxu0 %v656
  %740 = vmatprep.subr.bf16.mxu0 %v661
  %741 = vmatpush1.bf16.msra.mxu0 %v660
  %742 = vmatprep.subr.bf16.mxu0 %v665
  %743 = vmatpush1.bf16.msra.mxu0 %v664
  %744 = vmatprep.subr.bf16.mxu0 %v669
  %745 = vmatpush1.bf16.msra.mxu0 %v668
  %746 = vmatprep.subr.bf16.mxu0 %v673
  %747 = vmatpush1.bf16.msra.mxu0 %v672
  %748 = vmatprep.subr.bf16.mxu0 0
  %749 = vmatpush1.bf16.msra.mxu0 0
  %750 = vmatprep.subr.bf16.mxu0 0
  %751 = vmatpush1.bf16.msra.mxu0 0
  %752 = vmatprep.subr.bf16.mxu0 0
  %753 = vmatpush1.bf16.msra.mxu0 0
  %754 = vmatprep.subr.bf16.mxu0 0
  %755 = vmatpush1.bf16.msra.mxu0 0
  %756 = vmatprep.subr.bf16.mxu0 0
  %757 = vmatpush1.bf16.msra.mxu0 0
  %758 = vmatprep.subr.bf16.mxu0 0
  %759 = vmatpush1.bf16.msra.mxu0 0
  %760 = vmatprep.subr.bf16.mxu0 0
  %761 = vmatpush1.bf16.msra.mxu0 0
  %762 = vmatprep.mubr.bf16.mxu0 %v685
  %763 = vmatmul.mubr.bf16.gmra.mrb[0].mxu0 %v680
  %v764 = vpop.f32.mrb[0].mxu0
  %v765 = vadd.f32 0.0, %v764
  %v766 = vpop.f32.mrb[0].mxu0
  %v767 = vadd.f32 0.0, %v766
  %v768 = vpop.f32.mrb[0].mxu0
  %v769 = vadd.f32 0.0, %v768
  %v770 = vpop.f32.mrb[0].mxu0
  %v771 = vadd.f32 0.0, %v770
  %772 = vdwg.mxu0
  %v773 = vpack.c.bf16 %v726, %v722
  %v774 = vpack.c.bf16 %v728, %v724
  %v775 = vpack.c.bf16 %v769, %v765
  %v776 = vpack.c.bf16 %v771, %v767
  %v781 = vunpack.c.l.b16 %v773
  %v782 = vunpack.c.l.b16 %v774
  %v783 = vunpack.c.l.b16 %v775
  %v784 = vunpack.c.l.b16 %v776
  %v785 = vunpack.c.h.b16 %v773
  %v786 = vunpack.c.h.b16 %v774
  %v787 = vunpack.c.h.b16 %v775
  %v788 = vunpack.c.h.b16 %v776
  %v789 = vpack.c.b16 %v782, %v781
  %v790 = vpack.c.b16 %v784, %v783
  %v791 = vpack.c.b16 %v786, %v785
  %v792 = vpack.c.b16 %v788, %v787
  %797 = vst [vmem:[%s5] sm:$0xff] %v789
  %798 = vst [vmem:[%s5 + $0x8] sm:$0xff] %v790
  %799 = vst [vmem:[%s5 + $0x10] sm:$0xff] %v791
  %800 = vst [vmem:[%s5 + $0x18] sm:$0xff] %v792
  %v801 = vadd.f32 %v722, %v724
  %v802 = vadd.f32 %v801, %v765
  %v803 = vadd.f32 %v802, %v767
  %804 = vadd.xlane.f32.xlu0 %v803
  %v805 = vpop.xlane.xlu0 %804
  %v806 = vadd.f32 %v726, %v728
  %v807 = vadd.f32 %v806, %v769
  %v808 = vadd.f32 %v807, %v771
  %809 = vadd.xlane.f32.xlu0 %v808
  %v810 = vpop.xlane.xlu0 %809
  %vm811 = vcmask 7168
  %812 = vst.msk [vmem:[%s6] sm:$0xff] %vm811, %v805
  %813 = vst.msk [vmem:[%s6 + $0x8] sm:$0xff] %vm811, %v810
  %v814 = vmul.f32 %v722, %v722
  %v815 = vmul.f32 %v724, %v724
  %v816 = vmul.f32 %v765, %v765
  %v817 = vmul.f32 %v767, %v767
  %v818 = vmul.f32 %v726, %v726
  %v819 = vmul.f32 %v728, %v728
  %v820 = vmul.f32 %v769, %v769
  %v821 = vmul.f32 %v771, %v771
  %v822 = vadd.f32 %v814, %v815
  %v823 = vadd.f32 %v822, %v816
  %v824 = vadd.f32 %v823, %v817
  %825 = vadd.xlane.f32.xlu0 %v824
  %v826 = vpop.xlane.xlu0 %825
  %v827 = vadd.f32 %v818, %v819
  %v828 = vadd.f32 %v827, %v820
  %v829 = vadd.f32 %v828, %v821
  %830 = vadd.xlane.f32.xlu0 %v829
  %v831 = vpop.xlane.xlu0 %830
  %832 = vst.msk [vmem:[%s7] sm:$0xff] %vm811, %v826
  %833 = vst.msk [vmem:[%s7 + $0x8] sm:$0xff] %vm811, %v831
  // Predicated region
  $region22: #{midscope_conv2d.4} parent=0 // pred_check
    _
  $region23: #{midscope_conv2d.4} parent=0 // pred_check_branch
    %835 = sbr.rel (0) target = $region25
  $region24: #{midscope_conv2d.4} parent=0 // pred_region
    _
  $region25: #{midscope_conv2d.4} parent=0 // pred_fallthru
    _
  // Predicated region
  $region26: #{midscope_conv2d.4} parent=0 // pred_check
    _
  $region27: #{midscope_conv2d.4} parent=0 // pred_check_branch
    %837 = sbr.rel (0) target = $region29
  $region28: #{midscope_conv2d.4} parent=0 // pred_region
    _
  $region29: #{midscope_conv2d.4} parent=0 // pred_fallthru
    _
  // Predicated region
  $region30: #{midscope_conv2d.4} parent=0 // pred_check
    _
  $region31: #{midscope_conv2d.4} parent=0 // pred_check_branch
    %839 = sbr.rel (0) target = $region33
  $region32: #{midscope_conv2d.4} parent=0 // pred_region
    _
  $region33: #{midscope_conv2d.4} parent=0 // pred_fallthru
    _
  // Predicated region
  $region34: #{midscope_conv2d.4} parent=0 // pred_check
    _
  $region35: #{midscope_conv2d.4} parent=0 // pred_check_branch
    %841 = sbr.rel (0) target = $region37
  $region36: #{midscope_conv2d.4} parent=0 // pred_region
    _
  $region37: #{midscope_conv2d.4} parent=0 // pred_fallthru
    _
  // Predicated region
  $region38: #{midscope_conv2d.4} parent=0 // pred_check
    _
  $region39: #{midscope_conv2d.4} parent=0 // pred_check_branch
    %843 = sbr.rel (0) target = $region41
  $region40: #{midscope_conv2d.4} parent=0 // pred_region
    _
  $region41: #{midscope_conv2d.4} parent=0 // pred_fallthru
    _
  // Predicated region
  $region42: #{midscope_conv2d.4} parent=0 // pred_check
    _
  $region43: #{midscope_conv2d.4} parent=0 // pred_check_branch
    %845 = sbr.rel (0) target = $region45
  $region44: #{midscope_conv2d.4} parent=0 // pred_region
    _
  $region45: #{midscope_conv2d.4} parent=0 // pred_fallthru
    _

</llo_original>
